<compile_context>
chip_gen: v6e
topology: v6e:2x2x1
jax: 0.10.0
libtpu: 0.0.40
codegen_flags: <defaults>
</compile_context>

<pallas_src>
import jax
import jax.numpy as jnp
from jax import lax
from jax.experimental import pallas as pl
from jax.experimental.pallas import tpu as pltpu


NEG_SLOPE = 0.01  # PyTorch nn.LeakyReLU() default


# ---------------------------------------------------------------------------
# One-time (tiny) parameter-side preprocessing
# ---------------------------------------------------------------------------
def _stacked_toeplitz(w_oihw, W):
    """Stacked width-Toeplitz weights of shape (3*W*Cin, Wo*Cout).

    Row block kh (kh = 0,1,2), row (w*Cin + c), column (wo*Cout + o):
        wt[kh*W*Cin + w*Cin + c, wo*Cout + o] = w[o, c, kh, kw]
    where w == 2*wo + kw - 1 (taps falling in the W zero-padding stay zero).
    The row-block order matches the in-kernel lane concat [t0, t1, t2].
    """
    O, C, KH, KW = w_oihw.shape
    Wo = W // 2
    w_idx = jnp.arange(W)[:, None]
    wo_idx = jnp.arange(Wo)[None, :]
    blocks = []
    for kh in range(KH):
        m = jnp.zeros((W * C, Wo * O), jnp.float32)
        for kw in range(KW):
            place = (w_idx == 2 * wo_idx + kw - 1).astype(jnp.float32)  # (W, Wo)
            m = m + jnp.kron(place, w_oihw[:, :, kh, kw].T)             # (W*C, Wo*O)
        blocks.append(m)
    return jnp.concatenate(blocks, axis=0)                              # (3*W*C, Wo*O)


# ---------------------------------------------------------------------------
# In-kernel conv layer: 3x3 / stride-2 / pad-1 + bias + LeakyReLU
# ---------------------------------------------------------------------------
def _conv_block(in_ref, bb, H, wt_ref, b_ref):
    """in_ref: (bb*H, W*Cin) VMEM ref, rows = img*H + h, lanes = w*Cin + c.

    wt_ref: (3*W*Cin, Wo*Cout) stacked Toeplitz weights, b_ref: (1, Wo*Cout).
    Returns (bb*Ho, Wo*Cout) with rows = img*Ho + ho, lanes = wo*Cout + o.
    """
    Ho = H // 2
    M = bb * Ho
    WC = in_ref.shape[1]

    # kh=1 (center) and kh=2 (lower) H-taps: sublane-strided reads.
    t1 = in_ref[pl.ds(0, M, stride=2), :]            # rows img*H + 2*ho
    t2 = in_ref[pl.ds(1, M, stride=2), :]            # rows img*H + 2*ho + 1

    # kh=0 (upper) tap = t2 shifted down one output row.  Rows with ho == 0
    # are the H zero-padding (and would otherwise bleed across the image
    # boundary / wrap), so mask them to zero.  Ho is a power of two.
    rolled = pltpu.roll(t2, shift=1, axis=0)
    k = lax.broadcasted_iota(jnp.int32, (M, WC), 0)
    t0 = jnp.where((k & (Ho - 1)) != 0, rolled, 0.0)

    # One wide-K MXU matmul per layer (K = 3 * W * Cin).
    taps = jnp.concatenate([t0, t1, t2], axis=1)      # (M, 3*W*Cin)
    y = jnp.dot(taps, wt_ref[...], preferred_element_type=jnp.float32)
    y = y + b_ref[...]
    return jnp.maximum(y, NEG_SLOPE * y)              # LeakyReLU(0.01)


def _discriminator_kernel(x_ref,
                          wt1_ref, b1_ref,
                          wt2_ref, b2_ref,
                          wt3_ref, b3_ref,
                          wl_ref, bl_ref,
                          o_ref,
                          a1_ref, a2_ref, a3_ref):
    bb = o_ref.shape[0]

    a1_ref[...] = _conv_block(x_ref, bb, 32, wt1_ref, b1_ref)   # (bb*16, 16*dim)
    a2_ref[...] = _conv_block(a1_ref, bb, 16, wt2_ref, b2_ref)  # (bb*8,  16*dim)
    a3_ref[...] = _conv_block(a2_ref, bb, 8, wt3_ref, b3_ref)   # (bb*4,  16*dim)

    # Linear(4*4*4*dim -> 1): fold the spatial-h sum with stride-4 sublane
    # reads of the conv3 scratch, then a single lane reduction.  No MXU.
    acc = a3_ref[pl.ds(0, bb, stride=4), :] * wl_ref[pl.ds(0, 1), :]
    for h in range(1, 4):
        acc = acc + a3_ref[pl.ds(h, bb, stride=4), :] * wl_ref[pl.ds(h, 1), :]
    o_ref[...] = jnp.sum(acc, axis=1, keepdims=True) + bl_ref[...]   # (bb, 1)


# ---------------------------------------------------------------------------
# Wrapper
# ---------------------------------------------------------------------------
def discriminator_forward(x_nchw, params):
    N = x_nchw.shape[0]
    dim = params["w1"].shape[0]

    # Batch block size / grid (keep >= 8 sublane-rows everywhere; pad batch).
    if N >= 32:
        bb = 32
    elif N >= 16:
        bb = 16
    else:
        bb = 8
    g = (N + bb - 1) // bb
    npad = g * bb

    # Pad batch to npad and input channels 3 -> 4 (lane-dense 32*4 = 128),
    # then NCHW -> NHWC -> batch-row-flattened 2-D layout:
    #   rows = img*32 + h, lanes = w*4 + c.
    x = jnp.pad(x_nchw.astype(jnp.float32),
                ((0, npad - N), (0, 1), (0, 0), (0, 0)))
    x2 = jnp.transpose(x, (0, 2, 3, 1)).reshape(npad * 32, 32 * 4)

    # Constant operands (tiny; constant index maps -> fetched once).
    w1p = jnp.pad(params["w1"].astype(jnp.float32),
                  ((0, 0), (0, 1), (0, 0), (0, 0)))          # Cin 3 -> 4
    wt1 = _stacked_toeplitz(w1p, 32)                         # (384,      16*dim)
    wt2 = _stacked_toeplitz(params["w2"].astype(jnp.float32), 16)  # (48*dim, 16*dim)
    wt3 = _stacked_toeplitz(params["w3"].astype(jnp.float32), 8)   # (48*dim, 16*dim)
    b1 = jnp.tile(params["b1"], 16)[None, :]                 # (1, 16*dim)
    b2 = jnp.tile(params["b2"], 8)[None, :]                  # (1, 16*dim)
    b3 = jnp.tile(params["b3"], 4)[None, :]                  # (1, 16*dim)
    # Linear weight permuted from NCHW flatten (c, h, w) to the kernel's
    # (h, w, c) activation layout.
    wl = params["wl"].reshape(4 * dim, 4, 4).transpose(1, 2, 0).reshape(4, 16 * dim)
    bl = params["bl"].reshape(1, 1)

    out = pl.pallas_call(
        _discriminator_kernel,
        out_shape=jax.ShapeDtypeStruct((npad, 1), jnp.float32),
        grid=(g,),
        in_specs=[
            pl.BlockSpec((bb * 32, 32 * 4), lambda i: (i, 0)),
            pl.BlockSpec(wt1.shape, lambda i: (0, 0)),
            pl.BlockSpec(b1.shape, lambda i: (0, 0)),
            pl.BlockSpec(wt2.shape, lambda i: (0, 0)),
            pl.BlockSpec(b2.shape, lambda i: (0, 0)),
            pl.BlockSpec(wt3.shape, lambda i: (0, 0)),
            pl.BlockSpec(b3.shape, lambda i: (0, 0)),
            pl.BlockSpec(wl.shape, lambda i: (0, 0)),
            pl.BlockSpec(bl.shape, lambda i: (0, 0)),
        ],
        out_specs=pl.BlockSpec((bb, 1), lambda i: (i, 0)),
        scratch_shapes=[
            pltpu.VMEM((bb * 16, 16 * dim), jnp.float32),    # conv1 activations
            pltpu.VMEM((bb * 8, 16 * dim), jnp.float32),     # conv2 activations
            pltpu.VMEM((bb * 4, 16 * dim), jnp.float32),     # conv3 activations
        ],
        compiler_params=pltpu.CompilerParams(
            dimension_semantics=("parallel",)),
    )(x2, wt1, b1, wt2, b2, wt3, b3, wl, bl)

    return out[:N]


# ---------------------------------------------------------------------------
# Pure-JAX reference (lax.conv) for validation
# ---------------------------------------------------------------------------
def discriminator_reference(x_nchw, params):
    def conv(x, w, b):
        y = lax.conv_general_dilated(
            x, w, window_strides=(2, 2), padding=((1, 1), (1, 1)),
            dimension_numbers=("NCHW", "OIHW", "NCHW"))
        y = y + b.reshape(1, -1, 1, 1)
        return jnp.where(y >= 0.0, y, NEG_SLOPE * y)

    x = conv(x_nchw, params["w1"], params["b1"])
    x = conv(x, params["w2"], params["b2"])
    x = conv(x, params["w3"], params["b3"])
    x = x.reshape(x.shape[0], -1)
    return x @ params["wl"].T + params["bl"]


# ---------------------------------------------------------------------------
# Deterministic parameter init (PyTorch shapes: OIHW convs, (out, in) linear)
# ---------------------------------------------------------------------------
def init_params(dim, key):
    ks = jax.random.split(key, 8)
    s = 0.1
    return {
        "w1": s * jax.random.normal(ks[0], (dim, 3, 3, 3), jnp.float32),
        "b1": s * jax.random.normal(ks[1], (dim,), jnp.float32),
        "w2": s * jax.random.normal(ks[2], (2 * dim, dim, 3, 3), jnp.float32),
        "b2": s * jax.random.normal(ks[3], (2 * dim,), jnp.float32),
        "w3": s * jax.random.normal(ks[4], (4 * dim, 2 * dim, 3, 3), jnp.float32),
        "b3": s * jax.random.normal(ks[5], (4 * dim,), jnp.float32),
        "wl": s * jax.random.normal(ks[6], (1, 4 * 4 * 4 * dim), jnp.float32),
        "bl": s * jax.random.normal(ks[7], (1,), jnp.float32),
    }


if __name__ == "__main__":
    dim = 8          # args.dim (kept small; 16*dim = 128 lanes)

    key = jax.random.PRNGKey(0)
    k_x, k_p, k_x2 = jax.random.split(key, 3)
    params = init_params(dim, k_p)

    fwd = jax.jit(discriminator_forward)

    # Small batch (bb = 8, grid = 1, batch padded 2 -> 8).
    x = jax.random.normal(k_x, (2, 3, 32, 32), jnp.float32)
    out = jax.block_until_ready(fwd(x, params))
    assert out.shape == (2, 1), out.shape
    ref = discriminator_reference(x, params)
    err = float(jnp.max(jnp.abs(out - ref)))
    assert err < 1e-3, f"max abs error vs reference (batch=2): {err}"

    # Larger, non-multiple batch (bb = 32, grid = 2, batch padded 40 -> 64).
    xb = jax.random.normal(k_x2, (40, 3, 32, 32), jnp.float32)
    outb = jax.block_until_ready(fwd(xb, params))
    assert outb.shape == (40, 1), outb.shape
    refb = discriminator_reference(xb, params)
    errb = float(jnp.max(jnp.abs(outb - refb)))
    assert errb < 1e-3, f"max abs error vs reference (batch=40): {errb}"

    print("KERNEL_OK")
</pallas_src>

<mosaic_0001>
module attributes {stable_mosaic.version = 11 : i64} {
  func.func @_discriminator_kernel(%arg0: i32, %arg1: memref<256x128xf32, #tpu.memory_space<vmem>>, %arg2: memref<384x128xf32, #tpu.memory_space<vmem>>, %arg3: memref<1x128xf32, #tpu.memory_space<vmem>>, %arg4: memref<384x128xf32, #tpu.memory_space<vmem>>, %arg5: memref<1x128xf32, #tpu.memory_space<vmem>>, %arg6: memref<384x128xf32, #tpu.memory_space<vmem>>, %arg7: memref<1x128xf32, #tpu.memory_space<vmem>>, %arg8: memref<4x128xf32, #tpu.memory_space<vmem>>, %arg9: memref<1x1xf32, #tpu.memory_space<vmem>>, %arg10: memref<8x1xf32, #tpu.memory_space<vmem>>, %arg11: memref<128x128xf32, #tpu.memory_space<vmem>>, %arg12: memref<64x128xf32, #tpu.memory_space<vmem>>, %arg13: memref<32x128xf32, #tpu.memory_space<vmem>>) attributes {dimension_semantics = [#tpu.dimension_semantics<parallel>], iteration_bounds = array<i64: 1>, scalar_prefetch = 0 : i64, scratch_operands = 3 : i64, tpu.core_type = #tpu.core_type<tc>, window_params = [{transform_indices = @transform_0, window_bounds = array<i64: 256, 128>}, {pipeline_mode = #tpu.pipeline_mode<synchronous>, transform_indices = @transform_1, window_bounds = array<i64: 384, 128>}, {pipeline_mode = #tpu.pipeline_mode<synchronous>, transform_indices = @transform_2, window_bounds = array<i64: 1, 128>}, {pipeline_mode = #tpu.pipeline_mode<synchronous>, transform_indices = @transform_3, window_bounds = array<i64: 384, 128>}, {pipeline_mode = #tpu.pipeline_mode<synchronous>, transform_indices = @transform_4, window_bounds = array<i64: 1, 128>}, {pipeline_mode = #tpu.pipeline_mode<synchronous>, transform_indices = @transform_5, window_bounds = array<i64: 384, 128>}, {pipeline_mode = #tpu.pipeline_mode<synchronous>, transform_indices = @transform_6, window_bounds = array<i64: 1, 128>}, {pipeline_mode = #tpu.pipeline_mode<synchronous>, transform_indices = @transform_7, window_bounds = array<i64: 4, 128>}, {pipeline_mode = #tpu.pipeline_mode<synchronous>, transform_indices = @transform_8, window_bounds = array<i64: 1, 1>}, {transform_indices = @transform_9, window_bounds = array<i64: 8, 1>}]} {
    %c0 = arith.constant 0 : index
    %c0_0 = arith.constant 0 : index
    %0 = tpu.strided_load %arg1[%c0, %c0_0] {strides = array<i32: 2, 1>} : memref<256x128xf32, #tpu.memory_space<vmem>>, vector<128x128xf32>
    %c1 = arith.constant 1 : index
    %c0_1 = arith.constant 0 : index
    %1 = tpu.strided_load %arg1[%c1, %c0_1] {strides = array<i32: 2, 1>} : memref<256x128xf32, #tpu.memory_space<vmem>>, vector<128x128xf32>
    %c1_i32 = arith.constant 1 : i32
    %2 = tpu.dynamic_rotate %1 by %c1_i32 dim 0 : vector<128x128xf32>, i32 -> vector<128x128xf32>
    %3 = tpu.iota {dimensions = array<i32: 0>} : vector<128x128xi32>
    %c15_i32 = arith.constant 15 : i32
    %4 = vector.broadcast %c15_i32 : i32 to vector<128x128xi32>
    %5 = arith.andi %3, %4 : vector<128x128xi32>
    %c0_i32 = arith.constant 0 : i32
    %6 = vector.broadcast %c0_i32 : i32 to vector<128x128xi32>
    %7 = arith.cmpi ne, %5, %6 : vector<128x128xi32>
    %cst = arith.constant 0.000000e+00 : f32
    %8 = vector.broadcast %cst : f32 to vector<128x128xf32>
    %9 = arith.select %7, %2, %8 : vector<128x128xi1>, vector<128x128xf32>
    %10 = tpu.concatenate %9, %0, %1 in 1 : vector<128x128xf32>, vector<128x128xf32>, vector<128x128xf32> -> vector<128x384xf32>
    %c0_2 = arith.constant 0 : index
    %c0_3 = arith.constant 0 : index
    %11 = vector.load %arg2[%c0_2, %c0_3] : memref<384x128xf32, #tpu.memory_space<vmem>>, vector<384x128xf32>
    %cst_4 = arith.constant dense<0.000000e+00> : vector<128x128xf32>
    %12 = tpu.matmul %10, %11, %cst_4 {dimension_numbers = #tpu.dot_dimension_numbers<[1], [0], [0], [1], [0, 0, 1, 1], [], []>} : vector<128x384xf32>, vector<384x128xf32>, vector<128x128xf32> -> vector<128x128xf32>
    %c0_5 = arith.constant 0 : index
    %c0_6 = arith.constant 0 : index
    %13 = vector.load %arg3[%c0_5, %c0_6] : memref<1x128xf32, #tpu.memory_space<vmem>>, vector<1x128xf32>
    %14 = vector.broadcast %13 : vector<1x128xf32> to vector<128x128xf32>
    %15 = arith.addf %12, %14 : vector<128x128xf32>
    %cst_7 = arith.constant 0.00999999977 : f32
    %16 = vector.broadcast %cst_7 : f32 to vector<128x128xf32>
    %17 = arith.mulf %16, %15 : vector<128x128xf32>
    %18 = arith.maximumf %15, %17 : vector<128x128xf32>
    %c0_8 = arith.constant 0 : index
    %c0_9 = arith.constant 0 : index
    %19 = vector.load %arg11[%c0_8, %c0_9] : memref<128x128xf32, #tpu.memory_space<vmem>>, vector<128x128xf32>
    tpu.vector_store %arg11[%c0_8, %c0_9], %18 {strides = array<i32>} : memref<128x128xf32, #tpu.memory_space<vmem>>, vector<128x128xf32>,
    %c0_10 = arith.constant 0 : index
    %c0_11 = arith.constant 0 : index
    %20 = tpu.strided_load %arg11[%c0_10, %c0_11] {strides = array<i32: 2, 1>} : memref<128x128xf32, #tpu.memory_space<vmem>>, vector<64x128xf32>
    %c1_12 = arith.constant 1 : index
    %c0_13 = arith.constant 0 : index
    %21 = tpu.strided_load %arg11[%c1_12, %c0_13] {strides = array<i32: 2, 1>} : memref<128x128xf32, #tpu.memory_space<vmem>>, vector<64x128xf32>
    %c1_i32_14 = arith.constant 1 : i32
    %22 = tpu.dynamic_rotate %21 by %c1_i32_14 dim 0 : vector<64x128xf32>, i32 -> vector<64x128xf32>
    %23 = tpu.iota {dimensions = array<i32: 0>} : vector<64x128xi32>
    %c7_i32 = arith.constant 7 : i32
    %24 = vector.broadcast %c7_i32 : i32 to vector<64x128xi32>
    %25 = arith.andi %23, %24 : vector<64x128xi32>
    %c0_i32_15 = arith.constant 0 : i32
    %26 = vector.broadcast %c0_i32_15 : i32 to vector<64x128xi32>
    %27 = arith.cmpi ne, %25, %26 : vector<64x128xi32>
    %cst_16 = arith.constant 0.000000e+00 : f32
    %28 = vector.broadcast %cst_16 : f32 to vector<64x128xf32>
    %29 = arith.select %27, %22, %28 : vector<64x128xi1>, vector<64x128xf32>
    %30 = tpu.concatenate %29, %20, %21 in 1 : vector<64x128xf32>, vector<64x128xf32>, vector<64x128xf32> -> vector<64x384xf32>
    %c0_17 = arith.constant 0 : index
    %c0_18 = arith.constant 0 : index
    %31 = vector.load %arg4[%c0_17, %c0_18] : memref<384x128xf32, #tpu.memory_space<vmem>>, vector<384x128xf32>
    %cst_19 = arith.constant dense<0.000000e+00> : vector<64x128xf32>
    %32 = tpu.matmul %30, %31, %cst_19 {dimension_numbers = #tpu.dot_dimension_numbers<[1], [0], [0], [1], [0, 0, 1, 1], [], []>} : vector<64x384xf32>, vector<384x128xf32>, vector<64x128xf32> -> vector<64x128xf32>
    %c0_20 = arith.constant 0 : index
    %c0_21 = arith.constant 0 : index
    %33 = vector.load %arg5[%c0_20, %c0_21] : memref<1x128xf32, #tpu.memory_space<vmem>>, vector<1x128xf32>
    %34 = vector.broadcast %33 : vector<1x128xf32> to vector<64x128xf32>
    %35 = arith.addf %32, %34 : vector<64x128xf32>
    %cst_22 = arith.constant 0.00999999977 : f32
    %36 = vector.broadcast %cst_22 : f32 to vector<64x128xf32>
    %37 = arith.mulf %36, %35 : vector<64x128xf32>
    %38 = arith.maximumf %35, %37 : vector<64x128xf32>
    %c0_23 = arith.constant 0 : index
    %c0_24 = arith.constant 0 : index
    %39 = vector.load %arg12[%c0_23, %c0_24] : memref<64x128xf32, #tpu.memory_space<vmem>>, vector<64x128xf32>
    tpu.vector_store %arg12[%c0_23, %c0_24], %38 {strides = array<i32>} : memref<64x128xf32, #tpu.memory_space<vmem>>, vector<64x128xf32>,
    %c0_25 = arith.constant 0 : index
    %c0_26 = arith.constant 0 : index
    %40 = tpu.strided_load %arg12[%c0_25, %c0_26] {strides = array<i32: 2, 1>} : memref<64x128xf32, #tpu.memory_space<vmem>>, vector<32x128xf32>
    %c1_27 = arith.constant 1 : index
    %c0_28 = arith.constant 0 : index
    %41 = tpu.strided_load %arg12[%c1_27, %c0_28] {strides = array<i32: 2, 1>} : memref<64x128xf32, #tpu.memory_space<vmem>>, vector<32x128xf32>
    %c1_i32_29 = arith.constant 1 : i32
    %42 = tpu.dynamic_rotate %41 by %c1_i32_29 dim 0 : vector<32x128xf32>, i32 -> vector<32x128xf32>
    %43 = tpu.iota {dimensions = array<i32: 0>} : vector<32x128xi32>
    %c3_i32 = arith.constant 3 : i32
    %44 = vector.broadcast %c3_i32 : i32 to vector<32x128xi32>
    %45 = arith.andi %43, %44 : vector<32x128xi32>
    %c0_i32_30 = arith.constant 0 : i32
    %46 = vector.broadcast %c0_i32_30 : i32 to vector<32x128xi32>
    %47 = arith.cmpi ne, %45, %46 : vector<32x128xi32>
    %cst_31 = arith.constant 0.000000e+00 : f32
    %48 = vector.broadcast %cst_31 : f32 to vector<32x128xf32>
    %49 = arith.select %47, %42, %48 : vector<32x128xi1>, vector<32x128xf32>
    %50 = tpu.concatenate %49, %40, %41 in 1 : vector<32x128xf32>, vector<32x128xf32>, vector<32x128xf32> -> vector<32x384xf32>
    %c0_32 = arith.constant 0 : index
    %c0_33 = arith.constant 0 : index
    %51 = vector.load %arg6[%c0_32, %c0_33] : memref<384x128xf32, #tpu.memory_space<vmem>>, vector<384x128xf32>
    %cst_34 = arith.constant dense<0.000000e+00> : vector<32x128xf32>
    %52 = tpu.matmul %50, %51, %cst_34 {dimension_numbers = #tpu.dot_dimension_numbers<[1], [0], [0], [1], [0, 0, 1, 1], [], []>} : vector<32x384xf32>, vector<384x128xf32>, vector<32x128xf32> -> vector<32x128xf32>
    %c0_35 = arith.constant 0 : index
    %c0_36 = arith.constant 0 : index
    %53 = vector.load %arg7[%c0_35, %c0_36] : memref<1x128xf32, #tpu.memory_space<vmem>>, vector<1x128xf32>
    %54 = vector.broadcast %53 : vector<1x128xf32> to vector<32x128xf32>
    %55 = arith.addf %52, %54 : vector<32x128xf32>
    %cst_37 = arith.constant 0.00999999977 : f32
    %56 = vector.broadcast %cst_37 : f32 to vector<32x128xf32>
    %57 = arith.mulf %56, %55 : vector<32x128xf32>
    %58 = arith.maximumf %55, %57 : vector<32x128xf32>
    %c0_38 = arith.constant 0 : index
    %c0_39 = arith.constant 0 : index
    %59 = vector.load %arg13[%c0_38, %c0_39] : memref<32x128xf32, #tpu.memory_space<vmem>>, vector<32x128xf32>
    tpu.vector_store %arg13[%c0_38, %c0_39], %58 {strides = array<i32>} : memref<32x128xf32, #tpu.memory_space<vmem>>, vector<32x128xf32>,
    %c0_40 = arith.constant 0 : index
    %c0_41 = arith.constant 0 : index
    %60 = tpu.strided_load %arg13[%c0_40, %c0_41] {strides = array<i32: 4, 1>} : memref<32x128xf32, #tpu.memory_space<vmem>>, vector<8x128xf32>
    %c0_42 = arith.constant 0 : index
    %c0_43 = arith.constant 0 : index
    %61 = vector.load %arg8[%c0_42, %c0_43] : memref<4x128xf32, #tpu.memory_space<vmem>>, vector<1x128xf32>
    %62 = vector.broadcast %61 : vector<1x128xf32> to vector<8x128xf32>
    %63 = arith.mulf %60, %62 : vector<8x128xf32>
    %c1_44 = arith.constant 1 : index
    %c0_45 = arith.constant 0 : index
    %64 = tpu.strided_load %arg13[%c1_44, %c0_45] {strides = array<i32: 4, 1>} : memref<32x128xf32, #tpu.memory_space<vmem>>, vector<8x128xf32>
    %c1_46 = arith.constant 1 : index
    %c0_47 = arith.constant 0 : index
    %65 = vector.load %arg8[%c1_46, %c0_47] : memref<4x128xf32, #tpu.memory_space<vmem>>, vector<1x128xf32>
    %66 = vector.broadcast %65 : vector<1x128xf32> to vector<8x128xf32>
    %67 = arith.mulf %64, %66 : vector<8x128xf32>
    %68 = arith.addf %63, %67 : vector<8x128xf32>
    %c2 = arith.constant 2 : index
    %c0_48 = arith.constant 0 : index
    %69 = tpu.strided_load %arg13[%c2, %c0_48] {strides = array<i32: 4, 1>} : memref<32x128xf32, #tpu.memory_space<vmem>>, vector<8x128xf32>
    %c2_49 = arith.constant 2 : index
    %c0_50 = arith.constant 0 : index
    %70 = vector.load %arg8[%c2_49, %c0_50] : memref<4x128xf32, #tpu.memory_space<vmem>>, vector<1x128xf32>
    %71 = vector.broadcast %70 : vector<1x128xf32> to vector<8x128xf32>
    %72 = arith.mulf %69, %71 : vector<8x128xf32>
    %73 = arith.addf %68, %72 : vector<8x128xf32>
    %c3 = arith.constant 3 : index
    %c0_51 = arith.constant 0 : index
    %74 = tpu.strided_load %arg13[%c3, %c0_51] {strides = array<i32: 4, 1>} : memref<32x128xf32, #tpu.memory_space<vmem>>, vector<8x128xf32>
    %c3_52 = arith.constant 3 : index
    %c0_53 = arith.constant 0 : index
    %75 = vector.load %arg8[%c3_52, %c0_53] : memref<4x128xf32, #tpu.memory_space<vmem>>, vector<1x128xf32>
    %76 = vector.broadcast %75 : vector<1x128xf32> to vector<8x128xf32>
    %77 = arith.mulf %74, %76 : vector<8x128xf32>
    %78 = arith.addf %73, %77 : vector<8x128xf32>
    %cst_54 = arith.constant dense<0.000000e+00> : vector<8xf32>
    %79 = vector.multi_reduction <add>, %78, %cst_54 [1] : vector<8x128xf32> to vector<8xf32>
    %80 = vector.shape_cast %79 : vector<8xf32> to vector<8x1xf32>
    %c0_55 = arith.constant 0 : index
    %c0_56 = arith.constant 0 : index
    %81 = vector.load %arg9[%c0_55, %c0_56] : memref<1x1xf32, #tpu.memory_space<vmem>>, vector<1x1xf32>
    %82 = vector.broadcast %81 : vector<1x1xf32> to vector<8x1xf32>
    %83 = arith.addf %80, %82 : vector<8x1xf32>
    %c0_57 = arith.constant 0 : index
    %c0_58 = arith.constant 0 : index
    %84 = vector.load %arg10[%c0_57, %c0_58] : memref<8x1xf32, #tpu.memory_space<vmem>>, vector<8x1xf32>
    tpu.vector_store %arg10[%c0_57, %c0_58], %83 {strides = array<i32>} : memref<8x1xf32, #tpu.memory_space<vmem>>, vector<8x1xf32>,
    return
  }
  func.func @transform_0(%arg0: i32) -> (i32, i32) {
    %c0_i32 = arith.constant 0 : i32
    %c0_i32_0 = arith.constant 0 : i32
    return %arg0, %c0_i32 : i32, i32
  }
  func.func @transform_1(%arg0: i32) -> (i32, i32) {
    %c0_i32 = arith.constant 0 : i32
    %c0_i32_0 = arith.constant 0 : i32
    %c0_i32_1 = arith.constant 0 : i32
    return %c0_i32, %c0_i32_0 : i32, i32
  }
  func.func @transform_2(%arg0: i32) -> (i32, i32) {
    %c0_i32 = arith.constant 0 : i32
    %c0_i32_0 = arith.constant 0 : i32
    %c0_i32_1 = arith.constant 0 : i32
    return %c0_i32, %c0_i32_0 : i32, i32
  }
  func.func @transform_3(%arg0: i32) -> (i32, i32) {
    %c0_i32 = arith.constant 0 : i32
    %c0_i32_0 = arith.constant 0 : i32
    %c0_i32_1 = arith.constant 0 : i32
    return %c0_i32, %c0_i32_0 : i32, i32
  }
  func.func @transform_4(%arg0: i32) -> (i32, i32) {
    %c0_i32 = arith.constant 0 : i32
    %c0_i32_0 = arith.constant 0 : i32
    %c0_i32_1 = arith.constant 0 : i32
    return %c0_i32, %c0_i32_0 : i32, i32
  }
  func.func @transform_5(%arg0: i32) -> (i32, i32) {
    %c0_i32 = arith.constant 0 : i32
    %c0_i32_0 = arith.constant 0 : i32
    %c0_i32_1 = arith.constant 0 : i32
    return %c0_i32, %c0_i32_0 : i32, i32
  }
  func.func @transform_6(%arg0: i32) -> (i32, i32) {
    %c0_i32 = arith.constant 0 : i32
    %c0_i32_0 = arith.constant 0 : i32
    %c0_i32_1 = arith.constant 0 : i32
    return %c0_i32, %c0_i32_0 : i32, i32
  }
  func.func @transform_7(%arg0: i32) -> (i32, i32) {
    %c0_i32 = arith.constant 0 : i32
    %c0_i32_0 = arith.constant 0 : i32
    %c0_i32_1 = arith.constant 0 : i32
    return %c0_i32, %c0_i32_0 : i32, i32
  }
  func.func @transform_8(%arg0: i32) -> (i32, i32) {
    %c0_i32 = arith.constant 0 : i32
    %c0_i32_0 = arith.constant 0 : i32
    %c0_i32_1 = arith.constant 0 : i32
    return %c0_i32, %c0_i32_0 : i32, i32
  }
  func.func @transform_9(%arg0: i32) -> (i32, i32) {
    %c0_i32 = arith.constant 0 : i32
    %c0_i32_0 = arith.constant 0 : i32
    return %arg0, %c0_i32 : i32, i32
  }
}

</mosaic_0001>

<llo_original>
// kernel: tile.18
$region0: #{tile.18}
  #allocation0 [shape = 's32[1]{0}', space=sflag, size = 0x4, scoped, tag = 'scoped memory for tile.18']
  %s0 = inlined_call_operand.vmem [shape: f32[8], index: 0, kind: input, shape index: {}]
  %s1 = inlined_call_operand.vmem [shape: f32[16,8], index: 1, kind: output, shape index: {}]
  // Predicated region
  $region2: #{tile.18} parent=0 // pred_check
    _
  $region3: #{tile.18} parent=0 // pred_check_branch
    %3 = sbr.rel (0) target = $region5
  $region4: #{tile.18} parent=0 // pred_region
    _
  $region5: #{tile.18} parent=0 // pred_fallthru
    _
  %v4 = vld [vmem:[%s0] ss:$0 sm:$0xff]
  %5 = vst [vmem:[%s1] sm:$0xff] %v4
  %s6 = scalar_lea.vmem %s1, 8
  %7 = vst [vmem:[%s6] sm:$0xff] %v4

// kernel: tile.19
$region0: #{tile.19}
  %s0 = inlined_call_operand.vmem [shape: f32[16,8], index: 0, kind: input, shape index: {}]
  %s1 = inlined_call_operand.vmem [shape: f32[1,128], index: 1, kind: output, shape index: {}]
  $region1: #{tile.19} parent=0
    #allocation0 [shape = 'u8[4096]{0}', space=vmem, size = 0x1000, scoped, tag = 'scoped mem for output reshape']
    %v2 = vld [vmem:[%s0] sm:$0x1]
    %vm3 = vcmask 64512
    %4 = vst.msk [vmem:[#allocation0] sm:$0x1] %vm3, %v2
    %s5 = scalar_lea.vmem %s0, 15
    %v6 = vld [vmem:[%s5] sm:$0x1]
    %7 = vrot.lane.b32.xlu0 %v6, 120
    %v8 = vpop.permute.xlu0 %7
    %vm9 = vcmask 1048512
    %10 = vst.msk [vmem:[#allocation0] sm:$0x1] %vm9, %v8
    %s11 = scalar_lea.vmem %s0, 14
    %v12 = vld [vmem:[%s11] sm:$0x1]
    %13 = vrot.lane.b32.xlu0 %v12, 112
    %v14 = vpop.permute.xlu0 %13
    %vm15 = vcmask 982912
    %16 = vst.msk [vmem:[#allocation0] sm:$0x1] %vm15, %v14
    %s17 = scalar_lea.vmem %s0, 13
    %v18 = vld [vmem:[%s17] sm:$0x1]
    %19 = vrot.lane.b32.xlu0 %v18, 104
    %v20 = vpop.permute.xlu0 %19
    %vm21 = vcmask 917312
    %22 = vst.msk [vmem:[#allocation0] sm:$0x1] %vm21, %v20
    %s23 = scalar_lea.vmem %s0, 12
    %v24 = vld [vmem:[%s23] sm:$0x1]
    %25 = vrot.lane.b32.xlu0 %v24, 96
    %v26 = vpop.permute.xlu0 %25
    %vm27 = vcmask 851712
    %28 = vst.msk [vmem:[#allocation0] sm:$0x1] %vm27, %v26
    %s29 = scalar_lea.vmem %s0, 11
    %v30 = vld [vmem:[%s29] sm:$0x1]
    %31 = vrot.lane.b32.xlu0 %v30, 88
    %v32 = vpop.permute.xlu0 %31
    %vm33 = vcmask 786112
    %34 = vst.msk [vmem:[#allocation0] sm:$0x1] %vm33, %v32
    %s35 = scalar_lea.vmem %s0, 10
    %v36 = vld [vmem:[%s35] sm:$0x1]
    %37 = vrot.lane.b32.xlu0 %v36, 80
    %v38 = vpop.permute.xlu0 %37
    %vm39 = vcmask 720512
    %40 = vst.msk [vmem:[#allocation0] sm:$0x1] %vm39, %v38
    %s41 = scalar_lea.vmem %s0, 9
    %v42 = vld [vmem:[%s41] sm:$0x1]
    %43 = vrot.lane.b32.xlu0 %v42, 72
    %v44 = vpop.permute.xlu0 %43
    %vm45 = vcmask 654912
    %46 = vst.msk [vmem:[#allocation0] sm:$0x1] %vm45, %v44
    %s47 = scalar_lea.vmem %s0, 8
    %v48 = vld [vmem:[%s47] sm:$0x1]
    %49 = vrot.lane.b32.xlu0 %v48, 64
    %v50 = vpop.permute.xlu0 %49
    %vm51 = vcmask 589312
    %52 = vst.msk [vmem:[#allocation0] sm:$0x1] %vm51, %v50
    %s53 = scalar_lea.vmem %s0, 7
    %v54 = vld [vmem:[%s53] sm:$0x1]
    %55 = vrot.lane.b32.xlu0 %v54, 56
    %v56 = vpop.permute.xlu0 %55
    %vm57 = vcmask 523712
    %58 = vst.msk [vmem:[#allocation0] sm:$0x1] %vm57, %v56
    %s59 = scalar_lea.vmem %s0, 6
    %v60 = vld [vmem:[%s59] sm:$0x1]
    %61 = vrot.lane.b32.xlu0 %v60, 48
    %v62 = vpop.permute.xlu0 %61
    %vm63 = vcmask 458112
    %64 = vst.msk [vmem:[#allocation0] sm:$0x1] %vm63, %v62
    %s65 = scalar_lea.vmem %s0, 5
    %v66 = vld [vmem:[%s65] sm:$0x1]
    %67 = vrot.lane.b32.xlu0 %v66, 40
    %v68 = vpop.permute.xlu0 %67
    %vm69 = vcmask 392512
    %70 = vst.msk [vmem:[#allocation0] sm:$0x1] %vm69, %v68
    %s71 = scalar_lea.vmem %s0, 4
    %v72 = vld [vmem:[%s71] sm:$0x1]
    %73 = vrot.lane.b32.xlu0 %v72, 32
    %v74 = vpop.permute.xlu0 %73
    %vm75 = vcmask 326912
    %76 = vst.msk [vmem:[#allocation0] sm:$0x1] %vm75, %v74
    %s77 = scalar_lea.vmem %s0, 3
    %v78 = vld [vmem:[%s77] sm:$0x1]
    %79 = vrot.lane.b32.xlu0 %v78, 24
    %v80 = vpop.permute.xlu0 %79
    %vm81 = vcmask 261312
    %82 = vst.msk [vmem:[#allocation0] sm:$0x1] %vm81, %v80
    %s83 = scalar_lea.vmem %s0, 2
    %v84 = vld [vmem:[%s83] sm:$0x1]
    %85 = vrot.lane.b32.xlu0 %v84, 16
    %v86 = vpop.permute.xlu0 %85
    %vm87 = vcmask 195712
    %88 = vst.msk [vmem:[#allocation0] sm:$0x1] %vm87, %v86
    %s89 = scalar_lea.vmem %s0, 1
    %v90 = vld [vmem:[%s89] sm:$0x1]
    %91 = vrot.lane.b32.xlu0 %v90, 8
    %v92 = vpop.permute.xlu0 %91
    %vm93 = vcmask 130112
    %94 = vst.msk [vmem:[#allocation0] sm:$0x1] %vm93, %v92
    %s96 = sshll.u32 1, 1
    %s97 = ssub.s32 %s96, 1
    %v99 = vld [vmem:[#allocation0] sm:%s97]
    %s100 = sshll.u32 1, 1
    %s101 = ssub.s32 %s100, 1
    %102 = vst [vmem:[%s1] sm:%s101] %v99

// kernel: tile.23
$region0: #{tile.23}
  #allocation0 [shape = 's32[1]{0}', space=sflag, size = 0x4, scoped, tag = 'scoped memory for tile.23']
  %s0 = inlined_call_operand.vmem [shape: f32[16], index: 0, kind: input, shape index: {}]
  %s1 = inlined_call_operand.vmem [shape: f32[8,16], index: 1, kind: output, shape index: {}]
  // Predicated region
  $region2: #{tile.23} parent=0 // pred_check
    _
  $region3: #{tile.23} parent=0 // pred_check_branch
    %3 = sbr.rel (0) target = $region5
  $region4: #{tile.23} parent=0 // pred_region
    _
  $region5: #{tile.23} parent=0 // pred_fallthru
    _
  %v4 = vld [vmem:[%s0] ss:$0 sm:$0xff]
  %5 = vst [vmem:[%s1] sm:$0xff] %v4

// kernel: tile.24
$region0: #{tile.24}
  %s0 = inlined_call_operand.vmem [shape: f32[8,16], index: 0, kind: input, shape index: {}]
  %s1 = inlined_call_operand.vmem [shape: f32[1,128], index: 1, kind: output, shape index: {}]
  $region1: #{tile.24} parent=0
    #allocation0 [shape = 'u8[4096]{0}', space=vmem, size = 0x1000, scoped, tag = 'scoped mem for output reshape']
    %v2 = vld [vmem:[%s0] sm:$0x1]
    %vm3 = vcmask 130048
    %4 = vst.msk [vmem:[#allocation0] sm:$0x1] %vm3, %v2
    %s5 = scalar_lea.vmem %s0, 7
    %v6 = vld [vmem:[%s5] sm:$0x1]
    %7 = vrot.lane.b32.xlu0 %v6, 112
    %v8 = vpop.permute.xlu0 %7
    %vm9 = vcmask 1048448
    %10 = vst.msk [vmem:[#allocation0] sm:$0x1] %vm9, %v8
    %s11 = scalar_lea.vmem %s0, 6
    %v12 = vld [vmem:[%s11] sm:$0x1]
    %13 = vrot.lane.b32.xlu0 %v12, 96
    %v14 = vpop.permute.xlu0 %13
    %vm15 = vcmask 917248
    %16 = vst.msk [vmem:[#allocation0] sm:$0x1] %vm15, %v14
    %s17 = scalar_lea.vmem %s0, 5
    %v18 = vld [vmem:[%s17] sm:$0x1]
    %19 = vrot.lane.b32.xlu0 %v18, 80
    %v20 = vpop.permute.xlu0 %19
    %vm21 = vcmask 786048
    %22 = vst.msk [vmem:[#allocation0] sm:$0x1] %vm21, %v20
    %s23 = scalar_lea.vmem %s0, 4
    %v24 = vld [vmem:[%s23] sm:$0x1]
    %25 = vrot.lane.b32.xlu0 %v24, 64
    %v26 = vpop.permute.xlu0 %25
    %vm27 = vcmask 654848
    %28 = vst.msk [vmem:[#allocation0] sm:$0x1] %vm27, %v26
    %s29 = scalar_lea.vmem %s0, 3
    %v30 = vld [vmem:[%s29] sm:$0x1]
    %31 = vrot.lane.b32.xlu0 %v30, 48
    %v32 = vpop.permute.xlu0 %31
    %vm33 = vcmask 523648
    %34 = vst.msk [vmem:[#allocation0] sm:$0x1] %vm33, %v32
    %s35 = scalar_lea.vmem %s0, 2
    %v36 = vld [vmem:[%s35] sm:$0x1]
    %37 = vrot.lane.b32.xlu0 %v36, 32
    %v38 = vpop.permute.xlu0 %37
    %vm39 = vcmask 392448
    %40 = vst.msk [vmem:[#allocation0] sm:$0x1] %vm39, %v38
    %s41 = scalar_lea.vmem %s0, 1
    %v42 = vld [vmem:[%s41] sm:$0x1]
    %43 = vrot.lane.b32.xlu0 %v42, 16
    %v44 = vpop.permute.xlu0 %43
    %vm45 = vcmask 261248
    %46 = vst.msk [vmem:[#allocation0] sm:$0x1] %vm45, %v44
    %s48 = sshll.u32 1, 1
    %s49 = ssub.s32 %s48, 1
    %v51 = vld [vmem:[#allocation0] sm:%s49]
    %s52 = sshll.u32 1, 1
    %s53 = ssub.s32 %s52, 1
    %54 = vst [vmem:[%s1] sm:%s53] %v51

// kernel: tile.28
$region0: #{tile.28}
  #allocation0 [shape = 's32[1]{0}', space=sflag, size = 0x4, scoped, tag = 'scoped memory for tile.28']
  %s0 = inlined_call_operand.vmem [shape: f32[32], index: 0, kind: input, shape index: {}]
  %s1 = inlined_call_operand.vmem [shape: f32[4,32], index: 1, kind: output, shape index: {}]
  // Predicated region
  $region2: #{tile.28} parent=0 // pred_check
    _
  $region3: #{tile.28} parent=0 // pred_check_branch
    %3 = sbr.rel (0) target = $region5
  $region4: #{tile.28} parent=0 // pred_region
    _
  $region5: #{tile.28} parent=0 // pred_fallthru
    _
  %v4 = vld [vmem:[%s0] ss:$0 sm:$0xff]
  %5 = vst [vmem:[%s1] sm:$0xf] %v4

// kernel: tile.29
$region0: #{tile.29}
  %s0 = inlined_call_operand.vmem [shape: f32[4,32], index: 0, kind: input, shape index: {}]
  %s1 = inlined_call_operand.vmem [shape: f32[1,128], index: 1, kind: output, shape index: {}]
  $region1: #{tile.29} parent=0
    #allocation0 [shape = 'u8[4096]{0}', space=vmem, size = 0x1000, scoped, tag = 'scoped mem for output reshape']
    #allocation1 [shape = 'u8[4096]{0}', space=vmem, size = 0x1000, scoped, tag = 'scoped mem for input reshape']
    %s3 = sshll.u32 1, 4
    %s4 = ssub.s32 %s3, 1
    %v5 = vld [vmem:[%s0] sm:%s4]
    %6 = vst [vmem:[#allocation1] sm:%s4] %v5
    %v7 = vld [vmem:[#allocation1] sm:$0x1]
    %vm8 = vcmask 261120
    %9 = vst.msk [vmem:[#allocation0] sm:$0x1] %vm8, %v7
    %s10 = scalar_lea.vmem [#allocation1], 3
    %v11 = vld [vmem:[%s10] sm:$0x1]
    %12 = vrot.lane.b32.xlu0 %v11, 96
    %v13 = vpop.permute.xlu0 %12
    %vm14 = vcmask 1048320
    %15 = vst.msk [vmem:[#allocation0] sm:$0x1] %vm14, %v13
    %s16 = scalar_lea.vmem [#allocation1], 2
    %v17 = vld [vmem:[%s16] sm:$0x1]
    %18 = vrot.lane.b32.xlu0 %v17, 64
    %v19 = vpop.permute.xlu0 %18
    %vm20 = vcmask 785920
    %21 = vst.msk [vmem:[#allocation0] sm:$0x1] %vm20, %v19
    %s22 = scalar_lea.vmem [#allocation1], 1
    %v23 = vld [vmem:[%s22] sm:$0x1]
    %24 = vrot.lane.b32.xlu0 %v23, 32
    %v25 = vpop.permute.xlu0 %24
    %vm26 = vcmask 523520
    %27 = vst.msk [vmem:[#allocation0] sm:$0x1] %vm26, %v25
    %s29 = sshll.u32 1, 1
    %s30 = ssub.s32 %s29, 1
    %v32 = vld [vmem:[#allocation0] sm:%s30]
    %s33 = sshll.u32 1, 1
    %s34 = ssub.s32 %s33, 1
    %35 = vst [vmem:[%s1] sm:%s34] %v32

// kernel: discriminator_forward.1
$region0: #{discriminator_forward.1}
  #allocation0 [shape = 'u32[]', space=smem, size = 0x4, offset = 0x4, fixed_abs, tag = 'smem constant byte address 0x4 - core index']
  #allocation1 [shape = 'u32[144,128]{1,0:T(1,128)}', space=vmem, size = 0x12000, scoped, tag = 'internal scratch']
  #allocation2 [shape = 'f32[128,128]{1,0:T(8,128)}', space=vmem, size = 0x10000, scoped, tag = 'scratch operand']
  #allocation3 [shape = 'f32[64,128]{1,0:T(8,128)}', space=vmem, size = 0x8000, scoped, tag = 'scratch operand']
  #allocation4 [shape = 'f32[32,128]{1,0:T(8,128)}', space=vmem, size = 0x4000, scoped, tag = 'scratch operand']
  #allocation5 [shape = 'f32[1,1]{1,0:T(1,128)S(1)}', space=vmem, size = 0x200, scoped, tag = 'scoped memory for discriminator_forward.1']
  %s0 = inlined_call_operand.vmem [shape: f32[256,128], index: 0, kind: input, shape index: {}]
  %s1 = inlined_call_operand.vmem [shape: f32[384,128], index: 1, kind: input, shape index: {}]
  %s2 = inlined_call_operand.vmem [shape: f32[1,128], index: 2, kind: input, shape index: {}]
  %s3 = inlined_call_operand.vmem [shape: f32[384,128], index: 3, kind: input, shape index: {}]
  %s4 = inlined_call_operand.vmem [shape: f32[1,128], index: 4, kind: input, shape index: {}]
  %s5 = inlined_call_operand.vmem [shape: f32[384,128], index: 5, kind: input, shape index: {}]
  %s6 = inlined_call_operand.vmem [shape: f32[1,128], index: 6, kind: input, shape index: {}]
  %s7 = inlined_call_operand.vmem [shape: f32[4,128], index: 7, kind: input, shape index: {}]
  %s8 = inlined_call_operand.<no memory space> [shape: f32[1,1], index: 8, kind: input, shape index: {}]
  %s9 = inlined_call_operand.vmem [shape: f32[8,1], index: 9, kind: output, shape index: {}]
  %s10 = sld [smem:[#allocation0]]
  $region46: #{discriminator_forward.1} parent=0
    _
  %s12 = ssub.s32 1, %s10
  %s13 = scalar_select 0, %s12, %s10
  %v14 = vstv %s8
  %15 = vst [vmem:[#allocation5] sm:$0x1] %v14
  // Predicated region
  $region2: #{discriminator_forward.1} parent=0 // pred_check
    _
  $region3: #{discriminator_forward.1} parent=0 // pred_check_branch
    %17 = sbr.rel (0) target = $region5
  $region4: #{discriminator_forward.1} parent=0 // pred_region
    _
  $region5: #{discriminator_forward.1} parent=0 // pred_fallthru
    _
  // Predicated region
  $region6: #{discriminator_forward.1} parent=0 // pred_check
    _
  $region7: #{discriminator_forward.1} parent=0 // pred_check_branch
    %19 = sbr.rel (0) target = $region9
  $region8: #{discriminator_forward.1} parent=0 // pred_region
    _
  $region9: #{discriminator_forward.1} parent=0 // pred_fallthru
    _
  // Predicated region
  $region10: #{discriminator_forward.1} parent=0 // pred_check
    _
  $region11: #{discriminator_forward.1} parent=0 // pred_check_branch
    %21 = sbr.rel (0) target = $region13
  $region12: #{discriminator_forward.1} parent=0 // pred_region
    _
  $region13: #{discriminator_forward.1} parent=0 // pred_fallthru
    _
  // Predicated region
  $region14: #{discriminator_forward.1} parent=0 // pred_check
    _
  $region15: #{discriminator_forward.1} parent=0 // pred_check_branch
    %23 = sbr.rel (0) target = $region17
  $region16: #{discriminator_forward.1} parent=0 // pred_region
    _
  $region17: #{discriminator_forward.1} parent=0 // pred_fallthru
    _
  // Predicated region
  $region18: #{discriminator_forward.1} parent=0 // pred_check
    _
  $region19: #{discriminator_forward.1} parent=0 // pred_check_branch
    %25 = sbr.rel (0) target = $region21
  $region20: #{discriminator_forward.1} parent=0 // pred_region
    _
  $region21: #{discriminator_forward.1} parent=0 // pred_fallthru
    _
  // Predicated region
  $region22: #{discriminator_forward.1} parent=0 // pred_check
    _
  $region23: #{discriminator_forward.1} parent=0 // pred_check_branch
    %27 = sbr.rel (0) target = $region25
  $region24: #{discriminator_forward.1} parent=0 // pred_region
    _
  $region25: #{discriminator_forward.1} parent=0 // pred_fallthru
    _
  // Predicated region
  $region26: #{discriminator_forward.1} parent=0 // pred_check
    _
  $region27: #{discriminator_forward.1} parent=0 // pred_check_branch
    %29 = sbr.rel (0) target = $region29
  $region28: #{discriminator_forward.1} parent=0 // pred_region
    _
  $region29: #{discriminator_forward.1} parent=0 // pred_fallthru
    _
  // Predicated region
  $region30: #{discriminator_forward.1} parent=0 // pred_check
    _
  $region31: #{discriminator_forward.1} parent=0 // pred_check_branch
    %31 = sbr.rel (0) target = $region33
  $region32: #{discriminator_forward.1} parent=0 // pred_region
    _
  $region33: #{discriminator_forward.1} parent=0 // pred_fallthru
    _
  // Predicated region
  $region34: #{discriminator_forward.1} parent=0 // pred_check
    _
  $region35: #{discriminator_forward.1} parent=0 // pred_check_branch
    %33 = sbr.rel (0) target = $region37
  $region36: #{discriminator_forward.1} parent=0 // pred_region
    _
  $region37: #{discriminator_forward.1} parent=0 // pred_fallthru
    _
  %v34 = vld [vmem:[%s0] ss:$2 sm:$0xff]
  %s35 = scalar_lea.vmem %s0, 16
  %v36 = vld [vmem:[%s35] ss:$2 sm:$0xff]
  %s37 = scalar_lea.vmem %s0, 32
  %v38 = vld [vmem:[%s37] ss:$2 sm:$0xff]
  %s39 = scalar_lea.vmem %s0, 48
  %v40 = vld [vmem:[%s39] ss:$2 sm:$0xff]
  %s41 = scalar_lea.vmem %s0, 64
  %v42 = vld [vmem:[%s41] ss:$2 sm:$0xff]
  %s43 = scalar_lea.vmem %s0, 80
  %v44 = vld [vmem:[%s43] ss:$2 sm:$0xff]
  %s45 = scalar_lea.vmem %s0, 96
  %v46 = vld [vmem:[%s45] ss:$2 sm:$0xff]
  %s47 = scalar_lea.vmem %s0, 112
  %v48 = vld [vmem:[%s47] ss:$2 sm:$0xff]
  %s49 = scalar_lea.vmem %s0, 128
  %v50 = vld [vmem:[%s49] ss:$2 sm:$0xff]
  %s51 = scalar_lea.vmem %s0, 144
  %v52 = vld [vmem:[%s51] ss:$2 sm:$0xff]
  %s53 = scalar_lea.vmem %s0, 160
  %v54 = vld [vmem:[%s53] ss:$2 sm:$0xff]
  %s55 = scalar_lea.vmem %s0, 176
  %v56 = vld [vmem:[%s55] ss:$2 sm:$0xff]
  %s57 = scalar_lea.vmem %s0, 192
  %v58 = vld [vmem:[%s57] ss:$2 sm:$0xff]
  %s59 = scalar_lea.vmem %s0, 208
  %v60 = vld [vmem:[%s59] ss:$2 sm:$0xff]
  %s61 = scalar_lea.vmem %s0, 224
  %v62 = vld [vmem:[%s61] ss:$2 sm:$0xff]
  %s63 = scalar_lea.vmem %s0, 240
  %v64 = vld [vmem:[%s63] ss:$2 sm:$0xff]
  %s65 = scalar_lea.vmem %s0, 1
  %v66 = vld [vmem:[%s65] ss:$2 sm:$0xff]
  %s67 = scalar_lea.vmem %s0, 17
  %v68 = vld [vmem:[%s67] ss:$2 sm:$0xff]
  %s69 = scalar_lea.vmem %s0, 33
  %v70 = vld [vmem:[%s69] ss:$2 sm:$0xff]
  %s71 = scalar_lea.vmem %s0, 49
  %v72 = vld [vmem:[%s71] ss:$2 sm:$0xff]
  %s73 = scalar_lea.vmem %s0, 65
  %v74 = vld [vmem:[%s73] ss:$2 sm:$0xff]
  %s75 = scalar_lea.vmem %s0, 81
  %v76 = vld [vmem:[%s75] ss:$2 sm:$0xff]
  %s77 = scalar_lea.vmem %s0, 97
  %v78 = vld [vmem:[%s77] ss:$2 sm:$0xff]
  %s79 = scalar_lea.vmem %s0, 113
  %v80 = vld [vmem:[%s79] ss:$2 sm:$0xff]
  %s81 = scalar_lea.vmem %s0, 129
  %v82 = vld [vmem:[%s81] ss:$2 sm:$0xff]
  %s83 = scalar_lea.vmem %s0, 145
  %v84 = vld [vmem:[%s83] ss:$2 sm:$0xff]
  %s85 = scalar_lea.vmem %s0, 161
  %v86 = vld [vmem:[%s85] ss:$2 sm:$0xff]
  %s87 = scalar_lea.vmem %s0, 177
  %v88 = vld [vmem:[%s87] ss:$2 sm:$0xff]
  %s89 = scalar_lea.vmem %s0, 193
  %v90 = vld [vmem:[%s89] ss:$2 sm:$0xff]
  %s91 = scalar_lea.vmem %s0, 209
  %v92 = vld [vmem:[%s91] ss:$2 sm:$0xff]
  %s93 = scalar_lea.vmem %s0, 225
  %v94 = vld [vmem:[%s93] ss:$2 sm:$0xff]
  %s95 = scalar_lea.vmem %s0, 241
  %v96 = vld [vmem:[%s95] ss:$2 sm:$0xff]
  %v97 = vrot.slane %v66, 7
  %v98 = vrot.slane %v68, 7
  %v99 = vrot.slane %v70, 7
  %v100 = vrot.slane %v72, 7
  %v101 = vrot.slane %v74, 7
  %v102 = vrot.slane %v76, 7
  %v103 = vrot.slane %v78, 7
  %v104 = vrot.slane %v80, 7
  %v105 = vrot.slane %v82, 7
  %v106 = vrot.slane %v84, 7
  %v107 = vrot.slane %v86, 7
  %v108 = vrot.slane %v88, 7
  %v109 = vrot.slane %v90, 7
  %v110 = vrot.slane %v92, 7
  %v111 = vrot.slane %v94, 7
  %v112 = vrot.slane %v96, 7
  %v113 = vlaneseq
  %v114 = vshrl.u32 %v113, 7
  %vm115 = vcmp.lt.s32.totalorder %v114, 1
  %v116 = vsel %vm115, %v111, %v112
  %v117 = vsel %vm115, %v110, %v111
  %v118 = vsel %vm115, %v109, %v110
  %v119 = vsel %vm115, %v108, %v109
  %v120 = vsel %vm115, %v107, %v108
  %v121 = vsel %vm115, %v106, %v107
  %v122 = vsel %vm115, %v105, %v106
  %v123 = vsel %vm115, %v104, %v105
  %v124 = vsel %vm115, %v103, %v104
  %v125 = vsel %vm115, %v102, %v103
  %v126 = vsel %vm115, %v101, %v102
  %v127 = vsel %vm115, %v100, %v101
  %v128 = vsel %vm115, %v99, %v100
  %v129 = vsel %vm115, %v98, %v99
  %v130 = vsel %vm115, %v97, %v98
  %v131 = vsel %vm115, %v112, %v97
  %v132 = vadd.s32 %v114, 8
  %v133 = vadd.s32 %v114, 16
  %v134 = vadd.s32 %v114, 24
  %v135 = vadd.s32 %v114, 32
  %v136 = vadd.s32 %v114, 40
  %v137 = vadd.s32 %v114, 48
  %v138 = vadd.s32 %v114, 56
  %v139 = vadd.s32 %v114, 64
  %v140 = vadd.s32 %v114, 72
  %v141 = vadd.s32 %v114, 80
  %v142 = vadd.s32 %v114, 88
  %v143 = vadd.s32 %v114, 96
  %v144 = vadd.s32 %v114, 104
  %v145 = vadd.s32 %v114, 112
  %v146 = vadd.s32 %v114, 120
  %v147 = vand.u32 %v114, 15
  %v148 = vand.u32 %v132, 15
  %v149 = vand.u32 %v133, 15
  %v150 = vand.u32 %v134, 15
  %v151 = vand.u32 %v135, 15
  %v152 = vand.u32 %v136, 15
  %v153 = vand.u32 %v137, 15
  %v154 = vand.u32 %v138, 15
  %v155 = vand.u32 %v139, 15
  %v156 = vand.u32 %v140, 15
  %v157 = vand.u32 %v141, 15
  %v158 = vand.u32 %v142, 15
  %v159 = vand.u32 %v143, 15
  %v160 = vand.u32 %v144, 15
  %v161 = vand.u32 %v145, 15
  %v162 = vand.u32 %v146, 15
  %vm163 = vcmp.ne.s32.totalorder %v147, 0
  %vm164 = vcmp.ne.s32.totalorder %v148, 0
  %vm165 = vcmp.ne.s32.totalorder %v149, 0
  %vm166 = vcmp.ne.s32.totalorder %v150, 0
  %vm167 = vcmp.ne.s32.totalorder %v151, 0
  %vm168 = vcmp.ne.s32.totalorder %v152, 0
  %vm169 = vcmp.ne.s32.totalorder %v153, 0
  %vm170 = vcmp.ne.s32.totalorder %v154, 0
  %vm171 = vcmp.ne.s32.totalorder %v155, 0
  %vm172 = vcmp.ne.s32.totalorder %v156, 0
  %vm173 = vcmp.ne.s32.totalorder %v157, 0
  %vm174 = vcmp.ne.s32.totalorder %v158, 0
  %vm175 = vcmp.ne.s32.totalorder %v159, 0
  %vm176 = vcmp.ne.s32.totalorder %v160, 0
  %vm177 = vcmp.ne.s32.totalorder %v161, 0
  %vm178 = vcmp.ne.s32.totalorder %v162, 0
  %v179 = vsel %vm163, %v131, 0.0
  %v180 = vsel %vm164, %v130, 0.0
  %v181 = vsel %vm165, %v129, 0.0
  %v182 = vsel %vm166, %v128, 0.0
  %v183 = vsel %vm167, %v127, 0.0
  %v184 = vsel %vm168, %v126, 0.0
  %v185 = vsel %vm169, %v125, 0.0
  %v186 = vsel %vm170, %v124, 0.0
  %v187 = vsel %vm171, %v123, 0.0
  %v188 = vsel %vm172, %v122, 0.0
  %v189 = vsel %vm173, %v121, 0.0
  %v190 = vsel %vm174, %v120, 0.0
  %v191 = vsel %vm175, %v119, 0.0
  %v192 = vsel %vm176, %v118, 0.0
  %v193 = vsel %vm177, %v117, 0.0
  %v194 = vsel %vm178, %v116, 0.0
  %v195 = vld [vmem:[%s1] sm:$0xff]
  %v196 = vld [vmem:[%s1 + $0x8] sm:$0xff]
  %v197 = vld [vmem:[%s1 + $0x10] sm:$0xff]
  %v198 = vld [vmem:[%s1 + $0x18] sm:$0xff]
  %v199 = vld [vmem:[%s1 + $0x20] sm:$0xff]
  %v200 = vld [vmem:[%s1 + $0x28] sm:$0xff]
  %v201 = vld [vmem:[%s1 + $0x30] sm:$0xff]
  %v202 = vld [vmem:[%s1 + $0x38] sm:$0xff]
  %v203 = vld [vmem:[%s1 + $0x40] sm:$0xff]
  %v204 = vld [vmem:[%s1 + $0x48] sm:$0xff]
  %v205 = vld [vmem:[%s1 + $0x50] sm:$0xff]
  %v206 = vld [vmem:[%s1 + $0x58] sm:$0xff]
  %v207 = vld [vmem:[%s1 + $0x60] sm:$0xff]
  %v208 = vld [vmem:[%s1 + $0x68] sm:$0xff]
  %v209 = vld [vmem:[%s1 + $0x70] sm:$0xff]
  %v210 = vld [vmem:[%s1 + $0x78] sm:$0xff]
  %v211 = vld [vmem:[%s1 + $0x80] sm:$0xff]
  %v212 = vld [vmem:[%s1 + $0x88] sm:$0xff]
  %v213 = vld [vmem:[%s1 + $0x90] sm:$0xff]
  %v214 = vld [vmem:[%s1 + $0x98] sm:$0xff]
  %v215 = vld [vmem:[%s1 + $0xa0] sm:$0xff]
  %v216 = vld [vmem:[%s1 + $0xa8] sm:$0xff]
  %v217 = vld [vmem:[%s1 + $0xb0] sm:$0xff]
  %v218 = vld [vmem:[%s1 + $0xb8] sm:$0xff]
  %v219 = vld [vmem:[%s1 + $0xc0] sm:$0xff]
  %v220 = vld [vmem:[%s1 + $0xc8] sm:$0xff]
  %v221 = vld [vmem:[%s1 + $0xd0] sm:$0xff]
  %v222 = vld [vmem:[%s1 + $0xd8] sm:$0xff]
  %v223 = vld [vmem:[%s1 + $0xe0] sm:$0xff]
  %v224 = vld [vmem:[%s1 + $0xe8] sm:$0xff]
  %v225 = vld [vmem:[%s1 + $0xf0] sm:$0xff]
  %v226 = vld [vmem:[%s1 + $0xf8] sm:$0xff]
  %v227 = vld [vmem:[%s1 + $0x100] sm:$0xff]
  %v228 = vld [vmem:[%s1 + $0x108] sm:$0xff]
  %v229 = vld [vmem:[%s1 + $0x110] sm:$0xff]
  %v230 = vld [vmem:[%s1 + $0x118] sm:$0xff]
  %v231 = vld [vmem:[%s1 + $0x120] sm:$0xff]
  %v232 = vld [vmem:[%s1 + $0x128] sm:$0xff]
  %v233 = vld [vmem:[%s1 + $0x130] sm:$0xff]
  %v234 = vld [vmem:[%s1 + $0x138] sm:$0xff]
  %v235 = vld [vmem:[%s1 + $0x140] sm:$0xff]
  %v236 = vld [vmem:[%s1 + $0x148] sm:$0xff]
  %v237 = vld [vmem:[%s1 + $0x150] sm:$0xff]
  %v238 = vld [vmem:[%s1 + $0x158] sm:$0xff]
  %v239 = vld [vmem:[%s1 + $0x160] sm:$0xff]
  %v240 = vld [vmem:[%s1 + $0x168] sm:$0xff]
  %v241 = vld [vmem:[%s1 + $0x170] sm:$0xff]
  %v242 = vld [vmem:[%s1 + $0x178] sm:$0xff]
  %v243 = vld [vmem:[%s2] sm:$0x1]
  %v245 = vlaneseq
  %v246 = vshrl.u32 %v245, 7
  %v247 = vsub.s32 0, %v246
  %v248 = vrot.slane %v243, %v247
  %250 = vmatprep.subr.mxu0 0.0
  %251 = vmatpush1.msra.mxu0 %v210
  %252 = vmatprep.subr.mxu0 0.0
  %253 = vmatpush1.msra.mxu0 %v209
  %254 = vmatprep.subr.mxu0 0.0
  %255 = vmatpush1.msra.mxu0 %v208
  %256 = vmatprep.subr.mxu0 0.0
  %257 = vmatpush1.msra.mxu0 %v207
  %258 = vmatprep.subr.mxu0 0.0
  %259 = vmatpush1.msra.mxu0 %v206
  %260 = vmatprep.subr.mxu0 0.0
  %261 = vmatpush1.msra.mxu0 %v205
  %262 = vmatprep.subr.mxu0 0.0
  %263 = vmatpush1.msra.mxu0 %v204
  %264 = vmatprep.subr.mxu0 0.0
  %265 = vmatpush1.msra.mxu0 %v203
  %266 = vmatprep.subr.mxu0 0.0
  %267 = vmatpush1.msra.mxu0 %v202
  %268 = vmatprep.subr.mxu0 0.0
  %269 = vmatpush1.msra.mxu0 %v201
  %270 = vmatprep.subr.mxu0 0.0
  %271 = vmatpush1.msra.mxu0 %v200
  %272 = vmatprep.subr.mxu0 0.0
  %273 = vmatpush1.msra.mxu0 %v199
  %274 = vmatprep.subr.mxu0 0.0
  %275 = vmatpush1.msra.mxu0 %v198
  %276 = vmatprep.subr.mxu0 0.0
  %277 = vmatpush1.msra.mxu0 %v197
  %278 = vmatprep.subr.mxu0 0.0
  %279 = vmatpush1.msra.mxu0 %v196
  %280 = vmatprep.subr.mxu0 0.0
  %281 = vmatpush1.msra.mxu0 %v195
  %282 = vmatprep.subr.mxu0 0.0
  %283 = vmatpush2.msra.mxu0 %v226
  %284 = vmatprep.subr.mxu0 0.0
  %285 = vmatpush2.msra.mxu0 %v225
  %286 = vmatprep.subr.mxu0 0.0
  %287 = vmatpush2.msra.mxu0 %v224
  %288 = vmatprep.subr.mxu0 0.0
  %289 = vmatpush2.msra.mxu0 %v223
  %290 = vmatprep.subr.mxu0 0.0
  %291 = vmatpush2.msra.mxu0 %v222
  %292 = vmatprep.subr.mxu0 0.0
  %293 = vmatpush2.msra.mxu0 %v221
  %294 = vmatprep.subr.mxu0 0.0
  %295 = vmatpush2.msra.mxu0 %v220
  %296 = vmatprep.subr.mxu0 0.0
  %297 = vmatpush2.msra.mxu0 %v219
  %298 = vmatprep.subr.mxu0 0.0
  %299 = vmatpush2.msra.mxu0 %v218
  %300 = vmatprep.subr.mxu0 0.0
  %301 = vmatpush2.msra.mxu0 %v217
  %302 = vmatprep.subr.mxu0 0.0
  %303 = vmatpush2.msra.mxu0 %v216
  %304 = vmatprep.subr.mxu0 0.0
  %305 = vmatpush2.msra.mxu0 %v215
  %306 = vmatprep.subr.mxu0 0.0
  %307 = vmatpush2.msra.mxu0 %v214
  %308 = vmatprep.subr.mxu0 0.0
  %309 = vmatpush2.msra.mxu0 %v213
  %310 = vmatprep.subr.mxu0 0.0
  %311 = vmatpush2.msra.mxu0 %v212
  %312 = vmatprep.subr.mxu0 0.0
  %313 = vmatpush2.msra.mxu0 %v211
  %314 = vmatprep.mubr.f32.mxu0 %v34
  %315 = vmatmul.mubr.f32.gmra.mxu0 %v179
  %v316 = vpop.f32.mrf.mxu0
  %v317 = vadd.f32 %v248, %v316
  %v318 = vpop.f32.mrf.mxu0
  %319 = vmatprep.mubr.f32.mxu0 %v36
  %320 = vmatmul.mubr.f32.gmra.mxu0 %v180
  %v321 = vpop.f32.mrf.mxu0
  %v322 = vadd.f32 %v248, %v321
  %v323 = vpop.f32.mrf.mxu0
  %324 = vmatprep.mubr.f32.mxu0 %v38
  %325 = vmatmul.mubr.f32.gmra.mxu0 %v181
  %v326 = vpop.f32.mrf.mxu0
  %v327 = vadd.f32 %v248, %v326
  %v328 = vpop.f32.mrf.mxu0
  %329 = vmatprep.mubr.f32.mxu0 %v40
  %330 = vmatmul.mubr.f32.gmra.mxu0 %v182
  %v331 = vpop.f32.mrf.mxu0
  %v332 = vadd.f32 %v248, %v331
  %v333 = vpop.f32.mrf.mxu0
  %334 = vmatprep.mubr.f32.mxu0 %v42
  %335 = vmatmul.mubr.f32.gmra.mxu0 %v183
  %v336 = vpop.f32.mrf.mxu0
  %v337 = vadd.f32 %v248, %v336
  %v338 = vpop.f32.mrf.mxu0
  %339 = vmatprep.mubr.f32.mxu0 %v44
  %340 = vmatmul.mubr.f32.gmra.mxu0 %v184
  %v341 = vpop.f32.mrf.mxu0
  %v342 = vadd.f32 %v248, %v341
  %v343 = vpop.f32.mrf.mxu0
  %344 = vmatprep.mubr.f32.mxu0 %v46
  %345 = vmatmul.mubr.f32.gmra.mxu0 %v185
  %v346 = vpop.f32.mrf.mxu0
  %v347 = vadd.f32 %v248, %v346
  %v348 = vpop.f32.mrf.mxu0
  %349 = vmatprep.mubr.f32.mxu0 %v48
  %350 = vmatmul.mubr.f32.gmra.mxu0 %v186
  %v351 = vpop.f32.mrf.mxu0
  %v352 = vadd.f32 %v248, %v351
  %v353 = vpop.f32.mrf.mxu0
  %354 = vmatprep.mubr.f32.mxu0 %v50
  %355 = vmatmul.mubr.f32.gmra.mxu0 %v187
  %v356 = vpop.f32.mrf.mxu0
  %v357 = vadd.f32 %v248, %v356
  %v358 = vpop.f32.mrf.mxu0
  %359 = vmatprep.mubr.f32.mxu0 %v52
  %360 = vmatmul.mubr.f32.gmra.mxu0 %v188
  %v361 = vpop.f32.mrf.mxu0
  %v362 = vadd.f32 %v248, %v361
  %v363 = vpop.f32.mrf.mxu0
  %364 = vmatprep.mubr.f32.mxu0 %v54
  %365 = vmatmul.mubr.f32.gmra.mxu0 %v189
  %v366 = vpop.f32.mrf.mxu0
  %v367 = vadd.f32 %v248, %v366
  %v368 = vpop.f32.mrf.mxu0
  %369 = vmatprep.mubr.f32.mxu0 %v56
  %370 = vmatmul.mubr.f32.gmra.mxu0 %v190
  %v371 = vpop.f32.mrf.mxu0
  %v372 = vadd.f32 %v248, %v371
  %v373 = vpop.f32.mrf.mxu0
  %374 = vmatprep.mubr.f32.mxu0 %v58
  %375 = vmatmul.mubr.f32.gmra.mxu0 %v191
  %v376 = vpop.f32.mrf.mxu0
  %v377 = vadd.f32 %v248, %v376
  %v378 = vpop.f32.mrf.mxu0
  %379 = vmatprep.mubr.f32.mxu0 %v60
  %380 = vmatmul.mubr.f32.gmra.mxu0 %v192
  %v381 = vpop.f32.mrf.mxu0
  %v382 = vadd.f32 %v248, %v381
  %v383 = vpop.f32.mrf.mxu0
  %384 = vmatprep.mubr.f32.mxu0 %v62
  %385 = vmatmul.mubr.f32.gmra.mxu0 %v193
  %v386 = vpop.f32.mrf.mxu0
  %v387 = vadd.f32 %v248, %v386
  %v388 = vpop.f32.mrf.mxu0
  %389 = vmatprep.mubr.f32.mxu0 %v64
  %390 = vmatmul.mubr.f32.gmra.mxu0 %v194
  %v391 = vpop.f32.mrf.mxu0
  %v392 = vadd.f32 %v248, %v391
  %v393 = vpop.f32.mrf.mxu0
  %394 = vdwg.mxu0
  %395 = vmatprep.subr.mxu0 0.0
  %396 = vmatpush1.msra.mxu0 %v242
  %397 = vmatprep.subr.mxu0 0.0
  %398 = vmatpush1.msra.mxu0 %v241
  %399 = vmatprep.subr.mxu0 0.0
  %400 = vmatpush1.msra.mxu0 %v240
  %401 = vmatprep.subr.mxu0 0.0
  %402 = vmatpush1.msra.mxu0 %v239
  %403 = vmatprep.subr.mxu0 0.0
  %404 = vmatpush1.msra.mxu0 %v238
  %405 = vmatprep.subr.mxu0 0.0
  %406 = vmatpush1.msra.mxu0 %v237
  %407 = vmatprep.subr.mxu0 0.0
  %408 = vmatpush1.msra.mxu0 %v236
  %409 = vmatprep.subr.mxu0 0.0
  %410 = vmatpush1.msra.mxu0 %v235
  %411 = vmatprep.subr.mxu0 0.0
  %412 = vmatpush1.msra.mxu0 %v234
  %413 = vmatprep.subr.mxu0 0.0
  %414 = vmatpush1.msra.mxu0 %v233
  %415 = vmatprep.subr.mxu0 0.0
  %416 = vmatpush1.msra.mxu0 %v232
  %417 = vmatprep.subr.mxu0 0.0
  %418 = vmatpush1.msra.mxu0 %v231
  %419 = vmatprep.subr.mxu0 0.0
  %420 = vmatpush1.msra.mxu0 %v230
  %421 = vmatprep.subr.mxu0 0.0
  %422 = vmatpush1.msra.mxu0 %v229
  %423 = vmatprep.subr.mxu0 0.0
  %424 = vmatpush1.msra.mxu0 %v228
  %425 = vmatprep.subr.mxu0 0.0
  %426 = vmatpush1.msra.mxu0 %v227
  %427 = vmatprep.subr.mxu0 0.0
  %428 = vmatpush2.msra.mxu0 0.0
  %429 = vmatprep.subr.mxu0 0.0
  %430 = vmatpush2.msra.mxu0 0.0
  %431 = vmatprep.subr.mxu0 0.0
  %432 = vmatpush2.msra.mxu0 0.0
  %433 = vmatprep.subr.mxu0 0.0
  %434 = vmatpush2.msra.mxu0 0.0
  %435 = vmatprep.subr.mxu0 0.0
  %436 = vmatpush2.msra.mxu0 0.0
  %437 = vmatprep.subr.mxu0 0.0
  %438 = vmatpush2.msra.mxu0 0.0
  %439 = vmatprep.subr.mxu0 0.0
  %440 = vmatpush2.msra.mxu0 0.0
  %441 = vmatprep.subr.mxu0 0.0
  %442 = vmatpush2.msra.mxu0 0.0
  %443 = vmatprep.subr.mxu0 0.0
  %444 = vmatpush2.msra.mxu0 0.0
  %445 = vmatprep.subr.mxu0 0.0
  %446 = vmatpush2.msra.mxu0 0.0
  %447 = vmatprep.subr.mxu0 0.0
  %448 = vmatpush2.msra.mxu0 0.0
  %449 = vmatprep.subr.mxu0 0.0
  %450 = vmatpush2.msra.mxu0 0.0
  %451 = vmatprep.subr.mxu0 0.0
  %452 = vmatpush2.msra.mxu0 0.0
  %453 = vmatprep.subr.mxu0 0.0
  %454 = vmatpush2.msra.mxu0 0.0
  %455 = vmatprep.subr.mxu0 0.0
  %456 = vmatpush2.msra.mxu0 0.0
  %457 = vmatprep.subr.mxu0 0.0
  %458 = vmatpush2.msra.mxu0 0.0
  %459 = vmatprep.mubr.f32.mxu0 0.0
  %460 = vmatmul.mubr.f32.gmra.mxu0 %v66
  %v461 = vpop.f32.mrf.mxu0
  %v462 = vadd.f32 %v317, %v461
  %v463 = vpop.f32.mrf.mxu0
  %464 = vmatprep.mubr.f32.mxu0 0.0
  %465 = vmatmul.mubr.f32.gmra.mxu0 %v68
  %v466 = vpop.f32.mrf.mxu0
  %v467 = vadd.f32 %v322, %v466
  %v468 = vpop.f32.mrf.mxu0
  %469 = vmatprep.mubr.f32.mxu0 0.0
  %470 = vmatmul.mubr.f32.gmra.mxu0 %v70
  %v471 = vpop.f32.mrf.mxu0
  %v472 = vadd.f32 %v327, %v471
  %v473 = vpop.f32.mrf.mxu0
  %474 = vmatprep.mubr.f32.mxu0 0.0
  %475 = vmatmul.mubr.f32.gmra.mxu0 %v72
  %v476 = vpop.f32.mrf.mxu0
  %v477 = vadd.f32 %v332, %v476
  %v478 = vpop.f32.mrf.mxu0
  %479 = vmatprep.mubr.f32.mxu0 0.0
  %480 = vmatmul.mubr.f32.gmra.mxu0 %v74
  %v481 = vpop.f32.mrf.mxu0
  %v482 = vadd.f32 %v337, %v481
  %v483 = vpop.f32.mrf.mxu0
  %484 = vmatprep.mubr.f32.mxu0 0.0
  %485 = vmatmul.mubr.f32.gmra.mxu0 %v76
  %v486 = vpop.f32.mrf.mxu0
  %v487 = vadd.f32 %v342, %v486
  %v488 = vpop.f32.mrf.mxu0
  %489 = vmatprep.mubr.f32.mxu0 0.0
  %490 = vmatmul.mubr.f32.gmra.mxu0 %v78
  %v491 = vpop.f32.mrf.mxu0
  %v492 = vadd.f32 %v347, %v491
  %v493 = vpop.f32.mrf.mxu0
  %494 = vmatprep.mubr.f32.mxu0 0.0
  %495 = vmatmul.mubr.f32.gmra.mxu0 %v80
  %v496 = vpop.f32.mrf.mxu0
  %v497 = vadd.f32 %v352, %v496
  %v498 = vpop.f32.mrf.mxu0
  %499 = vmatprep.mubr.f32.mxu0 0.0
  %500 = vmatmul.mubr.f32.gmra.mxu0 %v82
  %v501 = vpop.f32.mrf.mxu0
  %v502 = vadd.f32 %v357, %v501
  %v503 = vpop.f32.mrf.mxu0
  %504 = vmatprep.mubr.f32.mxu0 0.0
  %505 = vmatmul.mubr.f32.gmra.mxu0 %v84
  %v506 = vpop.f32.mrf.mxu0
  %v507 = vadd.f32 %v362, %v506
  %v508 = vpop.f32.mrf.mxu0
  %509 = vmatprep.mubr.f32.mxu0 0.0
  %510 = vmatmul.mubr.f32.gmra.mxu0 %v86
  %v511 = vpop.f32.mrf.mxu0
  %v512 = vadd.f32 %v367, %v511
  %v513 = vpop.f32.mrf.mxu0
  %514 = vmatprep.mubr.f32.mxu0 0.0
  %515 = vmatmul.mubr.f32.gmra.mxu0 %v88
  %v516 = vpop.f32.mrf.mxu0
  %v517 = vadd.f32 %v372, %v516
  %v518 = vpop.f32.mrf.mxu0
  %519 = vmatprep.mubr.f32.mxu0 0.0
  %520 = vmatmul.mubr.f32.gmra.mxu0 %v90
  %v521 = vpop.f32.mrf.mxu0
  %v522 = vadd.f32 %v377, %v521
  %v523 = vpop.f32.mrf.mxu0
  %524 = vmatprep.mubr.f32.mxu0 0.0
  %525 = vmatmul.mubr.f32.gmra.mxu0 %v92
  %v526 = vpop.f32.mrf.mxu0
  %v527 = vadd.f32 %v382, %v526
  %v528 = vpop.f32.mrf.mxu0
  %529 = vmatprep.mubr.f32.mxu0 0.0
  %530 = vmatmul.mubr.f32.gmra.mxu0 %v94
  %v531 = vpop.f32.mrf.mxu0
  %v532 = vadd.f32 %v387, %v531
  %v533 = vpop.f32.mrf.mxu0
  %534 = vmatprep.mubr.f32.mxu0 0.0
  %535 = vmatmul.mubr.f32.gmra.mxu0 %v96
  %v536 = vpop.f32.mrf.mxu0
  %v537 = vadd.f32 %v392, %v536
  %v538 = vpop.f32.mrf.mxu0
  %539 = vdwg.mxu0
  %v540 = vmul.f32 %v462, 0.01
  %v541 = vmul.f32 %v467, 0.01
  %v542 = vmul.f32 %v472, 0.01
  %v543 = vmul.f32 %v477, 0.01
  %v544 = vmul.f32 %v482, 0.01
  %v545 = vmul.f32 %v487, 0.01
  %v546 = vmul.f32 %v492, 0.01
  %v547 = vmul.f32 %v497, 0.01
  %v548 = vmul.f32 %v502, 0.01
  %v549 = vmul.f32 %v507, 0.01
  %v550 = vmul.f32 %v512, 0.01
  %v551 = vmul.f32 %v517, 0.01
  %v552 = vmul.f32 %v522, 0.01
  %v553 = vmul.f32 %v527, 0.01
  %v554 = vmul.f32 %v532, 0.01
  %v555 = vmul.f32 %v537, 0.01
  %v556 = vmax.f32 %v462, %v540
  %v557 = vmax.f32 %v467, %v541
  %v558 = vmax.f32 %v472, %v542
  %v559 = vmax.f32 %v477, %v543
  %v560 = vmax.f32 %v482, %v544
  %v561 = vmax.f32 %v487, %v545
  %v562 = vmax.f32 %v492, %v546
  %v563 = vmax.f32 %v497, %v547
  %v564 = vmax.f32 %v502, %v548
  %v565 = vmax.f32 %v507, %v549
  %v566 = vmax.f32 %v512, %v550
  %v567 = vmax.f32 %v517, %v551
  %v568 = vmax.f32 %v522, %v552
  %v569 = vmax.f32 %v527, %v553
  %v570 = vmax.f32 %v532, %v554
  %v571 = vmax.f32 %v537, %v555
  %572 = vst [vmem:[#allocation2] sm:$0xff] %v556
  %573 = vst [vmem:[#allocation2 + $0x8] sm:$0xff] %v557
  %574 = vst [vmem:[#allocation2 + $0x10] sm:$0xff] %v558
  %575 = vst [vmem:[#allocation2 + $0x18] sm:$0xff] %v559
  %576 = vst [vmem:[#allocation2 + $0x20] sm:$0xff] %v560
  %577 = vst [vmem:[#allocation2 + $0x28] sm:$0xff] %v561
  %578 = vst [vmem:[#allocation2 + $0x30] sm:$0xff] %v562
  %579 = vst [vmem:[#allocation2 + $0x38] sm:$0xff] %v563
  %580 = vst [vmem:[#allocation2 + $0x40] sm:$0xff] %v564
  %581 = vst [vmem:[#allocation2 + $0x48] sm:$0xff] %v565
  %582 = vst [vmem:[#allocation2 + $0x50] sm:$0xff] %v566
  %583 = vst [vmem:[#allocation2 + $0x58] sm:$0xff] %v567
  %584 = vst [vmem:[#allocation2 + $0x60] sm:$0xff] %v568
  %585 = vst [vmem:[#allocation2 + $0x68] sm:$0xff] %v569
  %586 = vst [vmem:[#allocation2 + $0x70] sm:$0xff] %v570
  %587 = vst [vmem:[#allocation2 + $0x78] sm:$0xff] %v571
  %v588 = vld [vmem:[#allocation2] ss:$2 sm:$0xff]
  %s589 = scalar_lea.vmem [#allocation2], 16
  %v590 = vld [vmem:[%s589] ss:$2 sm:$0xff]
  %s591 = scalar_lea.vmem [#allocation2], 32
  %v592 = vld [vmem:[%s591] ss:$2 sm:$0xff]
  %s593 = scalar_lea.vmem [#allocation2], 48
  %v594 = vld [vmem:[%s593] ss:$2 sm:$0xff]
  %s595 = scalar_lea.vmem [#allocation2], 64
  %v596 = vld [vmem:[%s595] ss:$2 sm:$0xff]
  %s597 = scalar_lea.vmem [#allocation2], 80
  %v598 = vld [vmem:[%s597] ss:$2 sm:$0xff]
  %s599 = scalar_lea.vmem [#allocation2], 96
  %v600 = vld [vmem:[%s599] ss:$2 sm:$0xff]
  %s601 = scalar_lea.vmem [#allocation2], 112
  %v602 = vld [vmem:[%s601] ss:$2 sm:$0xff]
  %s603 = scalar_lea.vmem [#allocation2], 1
  %v604 = vld [vmem:[%s603] ss:$2 sm:$0xff]
  %s605 = scalar_lea.vmem [#allocation2], 17
  %v606 = vld [vmem:[%s605] ss:$2 sm:$0xff]
  %s607 = scalar_lea.vmem [#allocation2], 33
  %v608 = vld [vmem:[%s607] ss:$2 sm:$0xff]
  %s609 = scalar_lea.vmem [#allocation2], 49
  %v610 = vld [vmem:[%s609] ss:$2 sm:$0xff]
  %s611 = scalar_lea.vmem [#allocation2], 65
  %v612 = vld [vmem:[%s611] ss:$2 sm:$0xff]
  %s613 = scalar_lea.vmem [#allocation2], 81
  %v614 = vld [vmem:[%s613] ss:$2 sm:$0xff]
  %s615 = scalar_lea.vmem [#allocation2], 97
  %v616 = vld [vmem:[%s615] ss:$2 sm:$0xff]
  %s617 = scalar_lea.vmem [#allocation2], 113
  %v618 = vld [vmem:[%s617] ss:$2 sm:$0xff]
  %v619 = vrot.slane %v604, 7
  %v620 = vrot.slane %v606, 7
  %v621 = vrot.slane %v608, 7
  %v622 = vrot.slane %v610, 7
  %v623 = vrot.slane %v612, 7
  %v624 = vrot.slane %v614, 7
  %v625 = vrot.slane %v616, 7
  %v626 = vrot.slane %v618, 7
  %v627 = vsel %vm115, %v625, %v626
  %v628 = vsel %vm115, %v624, %v625
  %v629 = vsel %vm115, %v623, %v624
  %v630 = vsel %vm115, %v622, %v623
  %v631 = vsel %vm115, %v621, %v622
  %v632 = vsel %vm115, %v620, %v621
  %v633 = vsel %vm115, %v619, %v620
  %v634 = vsel %vm115, %v626, %v619
  %v635 = vand.u32 %v114, 7
  %v636 = vand.u32 %v132, 7
  %v637 = vand.u32 %v133, 7
  %v638 = vand.u32 %v134, 7
  %v639 = vand.u32 %v135, 7
  %v640 = vand.u32 %v136, 7
  %v641 = vand.u32 %v137, 7
  %v642 = vand.u32 %v138, 7
  %vm643 = vcmp.ne.s32.totalorder %v635, 0
  %vm644 = vcmp.ne.s32.totalorder %v636, 0
  %vm645 = vcmp.ne.s32.totalorder %v637, 0
  %vm646 = vcmp.ne.s32.totalorder %v638, 0
  %vm647 = vcmp.ne.s32.totalorder %v639, 0
  %vm648 = vcmp.ne.s32.totalorder %v640, 0
  %vm649 = vcmp.ne.s32.totalorder %v641, 0
  %vm650 = vcmp.ne.s32.totalorder %v642, 0
  %v651 = vsel %vm643, %v634, 0.0
  %v652 = vsel %vm644, %v633, 0.0
  %v653 = vsel %vm645, %v632, 0.0
  %v654 = vsel %vm646, %v631, 0.0
  %v655 = vsel %vm647, %v630, 0.0
  %v656 = vsel %vm648, %v629, 0.0
  %v657 = vsel %vm649, %v628, 0.0
  %v658 = vsel %vm650, %v627, 0.0
  %v659 = vld [vmem:[%s3] sm:$0xff]
  %v660 = vld [vmem:[%s3 + $0x8] sm:$0xff]
  %v661 = vld [vmem:[%s3 + $0x10] sm:$0xff]
  %v662 = vld [vmem:[%s3 + $0x18] sm:$0xff]
  %v663 = vld [vmem:[%s3 + $0x20] sm:$0xff]
  %v664 = vld [vmem:[%s3 + $0x28] sm:$0xff]
  %v665 = vld [vmem:[%s3 + $0x30] sm:$0xff]
  %v666 = vld [vmem:[%s3 + $0x38] sm:$0xff]
  %v667 = vld [vmem:[%s3 + $0x40] sm:$0xff]
  %v668 = vld [vmem:[%s3 + $0x48] sm:$0xff]
  %v669 = vld [vmem:[%s3 + $0x50] sm:$0xff]
  %v670 = vld [vmem:[%s3 + $0x58] sm:$0xff]
  %v671 = vld [vmem:[%s3 + $0x60] sm:$0xff]
  %v672 = vld [vmem:[%s3 + $0x68] sm:$0xff]
  %v673 = vld [vmem:[%s3 + $0x70] sm:$0xff]
  %v674 = vld [vmem:[%s3 + $0x78] sm:$0xff]
  %v675 = vld [vmem:[%s3 + $0x80] sm:$0xff]
  %v676 = vld [vmem:[%s3 + $0x88] sm:$0xff]
  %v677 = vld [vmem:[%s3 + $0x90] sm:$0xff]
  %v678 = vld [vmem:[%s3 + $0x98] sm:$0xff]
  %v679 = vld [vmem:[%s3 + $0xa0] sm:$0xff]
  %v680 = vld [vmem:[%s3 + $0xa8] sm:$0xff]
  %v681 = vld [vmem:[%s3 + $0xb0] sm:$0xff]
  %v682 = vld [vmem:[%s3 + $0xb8] sm:$0xff]
  %v683 = vld [vmem:[%s3 + $0xc0] sm:$0xff]
  %v684 = vld [vmem:[%s3 + $0xc8] sm:$0xff]
  %v685 = vld [vmem:[%s3 + $0xd0] sm:$0xff]
  %v686 = vld [vmem:[%s3 + $0xd8] sm:$0xff]
  %v687 = vld [vmem:[%s3 + $0xe0] sm:$0xff]
  %v688 = vld [vmem:[%s3 + $0xe8] sm:$0xff]
  %v689 = vld [vmem:[%s3 + $0xf0] sm:$0xff]
  %v690 = vld [vmem:[%s3 + $0xf8] sm:$0xff]
  %v691 = vld [vmem:[%s3 + $0x100] sm:$0xff]
  %v692 = vld [vmem:[%s3 + $0x108] sm:$0xff]
  %v693 = vld [vmem:[%s3 + $0x110] sm:$0xff]
  %v694 = vld [vmem:[%s3 + $0x118] sm:$0xff]
  %v695 = vld [vmem:[%s3 + $0x120] sm:$0xff]
  %v696 = vld [vmem:[%s3 + $0x128] sm:$0xff]
  %v697 = vld [vmem:[%s3 + $0x130] sm:$0xff]
  %v698 = vld [vmem:[%s3 + $0x138] sm:$0xff]
  %v699 = vld [vmem:[%s3 + $0x140] sm:$0xff]
  %v700 = vld [vmem:[%s3 + $0x148] sm:$0xff]
  %v701 = vld [vmem:[%s3 + $0x150] sm:$0xff]
  %v702 = vld [vmem:[%s3 + $0x158] sm:$0xff]
  %v703 = vld [vmem:[%s3 + $0x160] sm:$0xff]
  %v704 = vld [vmem:[%s3 + $0x168] sm:$0xff]
  %v705 = vld [vmem:[%s3 + $0x170] sm:$0xff]
  %v706 = vld [vmem:[%s3 + $0x178] sm:$0xff]
  %v707 = vld [vmem:[%s4] sm:$0x1]
  %v709 = vlaneseq
  %v710 = vshrl.u32 %v709, 7
  %v711 = vsub.s32 0, %v710
  %v712 = vrot.slane %v707, %v711
  %714 = vmatprep.subr.mxu0 0.0
  %715 = vmatpush1.msra.mxu0 %v674
  %716 = vmatprep.subr.mxu0 0.0
  %717 = vmatpush1.msra.mxu0 %v673
  %718 = vmatprep.subr.mxu0 0.0
  %719 = vmatpush1.msra.mxu0 %v672
  %720 = vmatprep.subr.mxu0 0.0
  %721 = vmatpush1.msra.mxu0 %v671
  %722 = vmatprep.subr.mxu0 0.0
  %723 = vmatpush1.msra.mxu0 %v670
  %724 = vmatprep.subr.mxu0 0.0
  %725 = vmatpush1.msra.mxu0 %v669
  %726 = vmatprep.subr.mxu0 0.0
  %727 = vmatpush1.msra.mxu0 %v668
  %728 = vmatprep.subr.mxu0 0.0
  %729 = vmatpush1.msra.mxu0 %v667
  %730 = vmatprep.subr.mxu0 0.0
  %731 = vmatpush1.msra.mxu0 %v666
  %732 = vmatprep.subr.mxu0 0.0
  %733 = vmatpush1.msra.mxu0 %v665
  %734 = vmatprep.subr.mxu0 0.0
  %735 = vmatpush1.msra.mxu0 %v664
  %736 = vmatprep.subr.mxu0 0.0
  %737 = vmatpush1.msra.mxu0 %v663
  %738 = vmatprep.subr.mxu0 0.0
  %739 = vmatpush1.msra.mxu0 %v662
  %740 = vmatprep.subr.mxu0 0.0
  %741 = vmatpush1.msra.mxu0 %v661
  %742 = vmatprep.subr.mxu0 0.0
  %743 = vmatpush1.msra.mxu0 %v660
  %744 = vmatprep.subr.mxu0 0.0
  %745 = vmatpush1.msra.mxu0 %v659
  %746 = vmatprep.subr.mxu0 0.0
  %747 = vmatpush2.msra.mxu0 %v690
  %748 = vmatprep.subr.mxu0 0.0
  %749 = vmatpush2.msra.mxu0 %v689
  %750 = vmatprep.subr.mxu0 0.0
  %751 = vmatpush2.msra.mxu0 %v688
  %752 = vmatprep.subr.mxu0 0.0
  %753 = vmatpush2.msra.mxu0 %v687
  %754 = vmatprep.subr.mxu0 0.0
  %755 = vmatpush2.msra.mxu0 %v686
  %756 = vmatprep.subr.mxu0 0.0
  %757 = vmatpush2.msra.mxu0 %v685
  %758 = vmatprep.subr.mxu0 0.0
  %759 = vmatpush2.msra.mxu0 %v684
  %760 = vmatprep.subr.mxu0 0.0
  %761 = vmatpush2.msra.mxu0 %v683
  %762 = vmatprep.subr.mxu0 0.0
  %763 = vmatpush2.msra.mxu0 %v682
  %764 = vmatprep.subr.mxu0 0.0
  %765 = vmatpush2.msra.mxu0 %v681
  %766 = vmatprep.subr.mxu0 0.0
  %767 = vmatpush2.msra.mxu0 %v680
  %768 = vmatprep.subr.mxu0 0.0
  %769 = vmatpush2.msra.mxu0 %v679
  %770 = vmatprep.subr.mxu0 0.0
  %771 = vmatpush2.msra.mxu0 %v678
  %772 = vmatprep.subr.mxu0 0.0
  %773 = vmatpush2.msra.mxu0 %v677
  %774 = vmatprep.subr.mxu0 0.0
  %775 = vmatpush2.msra.mxu0 %v676
  %776 = vmatprep.subr.mxu0 0.0
  %777 = vmatpush2.msra.mxu0 %v675
  %778 = vmatprep.mubr.f32.mxu0 %v588
  %779 = vmatmul.mubr.f32.gmra.mxu0 %v651
  %v780 = vpop.f32.mrf.mxu0
  %v781 = vadd.f32 %v712, %v780
  %v782 = vpop.f32.mrf.mxu0
  %783 = vmatprep.mubr.f32.mxu0 %v590
  %784 = vmatmul.mubr.f32.gmra.mxu0 %v652
  %v785 = vpop.f32.mrf.mxu0
  %v786 = vadd.f32 %v712, %v785
  %v787 = vpop.f32.mrf.mxu0
  %788 = vmatprep.mubr.f32.mxu0 %v592
  %789 = vmatmul.mubr.f32.gmra.mxu0 %v653
  %v790 = vpop.f32.mrf.mxu0
  %v791 = vadd.f32 %v712, %v790
  %v792 = vpop.f32.mrf.mxu0
  %793 = vmatprep.mubr.f32.mxu0 %v594
  %794 = vmatmul.mubr.f32.gmra.mxu0 %v654
  %v795 = vpop.f32.mrf.mxu0
  %v796 = vadd.f32 %v712, %v795
  %v797 = vpop.f32.mrf.mxu0
  %798 = vmatprep.mubr.f32.mxu0 %v596
  %799 = vmatmul.mubr.f32.gmra.mxu0 %v655
  %v800 = vpop.f32.mrf.mxu0
  %v801 = vadd.f32 %v712, %v800
  %v802 = vpop.f32.mrf.mxu0
  %803 = vmatprep.mubr.f32.mxu0 %v598
  %804 = vmatmul.mubr.f32.gmra.mxu0 %v656
  %v805 = vpop.f32.mrf.mxu0
  %v806 = vadd.f32 %v712, %v805
  %v807 = vpop.f32.mrf.mxu0
  %808 = vmatprep.mubr.f32.mxu0 %v600
  %809 = vmatmul.mubr.f32.gmra.mxu0 %v657
  %v810 = vpop.f32.mrf.mxu0
  %v811 = vadd.f32 %v712, %v810
  %v812 = vpop.f32.mrf.mxu0
  %813 = vmatprep.mubr.f32.mxu0 %v602
  %814 = vmatmul.mubr.f32.gmra.mxu0 %v658
  %v815 = vpop.f32.mrf.mxu0
  %v816 = vadd.f32 %v712, %v815
  %v817 = vpop.f32.mrf.mxu0
  %818 = vdwg.mxu0
  %819 = vmatprep.subr.mxu0 0.0
  %820 = vmatpush1.msra.mxu0 %v706
  %821 = vmatprep.subr.mxu0 0.0
  %822 = vmatpush1.msra.mxu0 %v705
  %823 = vmatprep.subr.mxu0 0.0
  %824 = vmatpush1.msra.mxu0 %v704
  %825 = vmatprep.subr.mxu0 0.0
  %826 = vmatpush1.msra.mxu0 %v703
  %827 = vmatprep.subr.mxu0 0.0
  %828 = vmatpush1.msra.mxu0 %v702
  %829 = vmatprep.subr.mxu0 0.0
  %830 = vmatpush1.msra.mxu0 %v701
  %831 = vmatprep.subr.mxu0 0.0
  %832 = vmatpush1.msra.mxu0 %v700
  %833 = vmatprep.subr.mxu0 0.0
  %834 = vmatpush1.msra.mxu0 %v699
  %835 = vmatprep.subr.mxu0 0.0
  %836 = vmatpush1.msra.mxu0 %v698
  %837 = vmatprep.subr.mxu0 0.0
  %838 = vmatpush1.msra.mxu0 %v697
  %839 = vmatprep.subr.mxu0 0.0
  %840 = vmatpush1.msra.mxu0 %v696
  %841 = vmatprep.subr.mxu0 0.0
  %842 = vmatpush1.msra.mxu0 %v695
  %843 = vmatprep.subr.mxu0 0.0
  %844 = vmatpush1.msra.mxu0 %v694
  %845 = vmatprep.subr.mxu0 0.0
  %846 = vmatpush1.msra.mxu0 %v693
  %847 = vmatprep.subr.mxu0 0.0
  %848 = vmatpush1.msra.mxu0 %v692
  %849 = vmatprep.subr.mxu0 0.0
  %850 = vmatpush1.msra.mxu0 %v691
  %851 = vmatprep.subr.mxu0 0.0
  %852 = vmatpush2.msra.mxu0 0.0
  %853 = vmatprep.subr.mxu0 0.0
  %854 = vmatpush2.msra.mxu0 0.0
  %855 = vmatprep.subr.mxu0 0.0
  %856 = vmatpush2.msra.mxu0 0.0
  %857 = vmatprep.subr.mxu0 0.0
  %858 = vmatpush2.msra.mxu0 0.0
  %859 = vmatprep.subr.mxu0 0.0
  %860 = vmatpush2.msra.mxu0 0.0
  %861 = vmatprep.subr.mxu0 0.0
  %862 = vmatpush2.msra.mxu0 0.0
  %863 = vmatprep.subr.mxu0 0.0
  %864 = vmatpush2.msra.mxu0 0.0
  %865 = vmatprep.subr.mxu0 0.0
  %866 = vmatpush2.msra.mxu0 0.0
  %867 = vmatprep.subr.mxu0 0.0
  %868 = vmatpush2.msra.mxu0 0.0
  %869 = vmatprep.subr.mxu0 0.0
  %870 = vmatpush2.msra.mxu0 0.0
  %871 = vmatprep.subr.mxu0 0.0
  %872 = vmatpush2.msra.mxu0 0.0
  %873 = vmatprep.subr.mxu0 0.0
  %874 = vmatpush2.msra.mxu0 0.0
  %875 = vmatprep.subr.mxu0 0.0
  %876 = vmatpush2.msra.mxu0 0.0
  %877 = vmatprep.subr.mxu0 0.0
  %878 = vmatpush2.msra.mxu0 0.0
  %879 = vmatprep.subr.mxu0 0.0
  %880 = vmatpush2.msra.mxu0 0.0
  %881 = vmatprep.subr.mxu0 0.0
  %882 = vmatpush2.msra.mxu0 0.0
  %883 = vmatprep.mubr.f32.mxu0 0.0
  %884 = vmatmul.mubr.f32.gmra.mxu0 %v604
  %v885 = vpop.f32.mrf.mxu0
  %v886 = vadd.f32 %v781, %v885
  %v887 = vpop.f32.mrf.mxu0
  %888 = vmatprep.mubr.f32.mxu0 0.0
  %889 = vmatmul.mubr.f32.gmra.mxu0 %v606
  %v890 = vpop.f32.mrf.mxu0
  %v891 = vadd.f32 %v786, %v890
  %v892 = vpop.f32.mrf.mxu0
  %893 = vmatprep.mubr.f32.mxu0 0.0
  %894 = vmatmul.mubr.f32.gmra.mxu0 %v608
  %v895 = vpop.f32.mrf.mxu0
  %v896 = vadd.f32 %v791, %v895
  %v897 = vpop.f32.mrf.mxu0
  %898 = vmatprep.mubr.f32.mxu0 0.0
  %899 = vmatmul.mubr.f32.gmra.mxu0 %v610
  %v900 = vpop.f32.mrf.mxu0
  %v901 = vadd.f32 %v796, %v900
  %v902 = vpop.f32.mrf.mxu0
  %903 = vmatprep.mubr.f32.mxu0 0.0
  %904 = vmatmul.mubr.f32.gmra.mxu0 %v612
  %v905 = vpop.f32.mrf.mxu0
  %v906 = vadd.f32 %v801, %v905
  %v907 = vpop.f32.mrf.mxu0
  %908 = vmatprep.mubr.f32.mxu0 0.0
  %909 = vmatmul.mubr.f32.gmra.mxu0 %v614
  %v910 = vpop.f32.mrf.mxu0
  %v911 = vadd.f32 %v806, %v910
  %v912 = vpop.f32.mrf.mxu0
  %913 = vmatprep.mubr.f32.mxu0 0.0
  %914 = vmatmul.mubr.f32.gmra.mxu0 %v616
  %v915 = vpop.f32.mrf.mxu0
  %v916 = vadd.f32 %v811, %v915
  %v917 = vpop.f32.mrf.mxu0
  %918 = vmatprep.mubr.f32.mxu0 0.0
  %919 = vmatmul.mubr.f32.gmra.mxu0 %v618
  %v920 = vpop.f32.mrf.mxu0
  %v921 = vadd.f32 %v816, %v920
  %v922 = vpop.f32.mrf.mxu0
  %923 = vdwg.mxu0
  %v924 = vmul.f32 %v886, 0.01
  %v925 = vmul.f32 %v891, 0.01
  %v926 = vmul.f32 %v896, 0.01
  %v927 = vmul.f32 %v901, 0.01
  %v928 = vmul.f32 %v906, 0.01
  %v929 = vmul.f32 %v911, 0.01
  %v930 = vmul.f32 %v916, 0.01
  %v931 = vmul.f32 %v921, 0.01
  %v932 = vmax.f32 %v886, %v924
  %v933 = vmax.f32 %v891, %v925
  %v934 = vmax.f32 %v896, %v926
  %v935 = vmax.f32 %v901, %v927
  %v936 = vmax.f32 %v906, %v928
  %v937 = vmax.f32 %v911, %v929
  %v938 = vmax.f32 %v916, %v930
  %v939 = vmax.f32 %v921, %v931
  %940 = vst [vmem:[#allocation3] sm:$0xff] %v932
  %941 = vst [vmem:[#allocation3 + $0x8] sm:$0xff] %v933
  %942 = vst [vmem:[#allocation3 + $0x10] sm:$0xff] %v934
  %943 = vst [vmem:[#allocation3 + $0x18] sm:$0xff] %v935
  %944 = vst [vmem:[#allocation3 + $0x20] sm:$0xff] %v936
  %945 = vst [vmem:[#allocation3 + $0x28] sm:$0xff] %v937
  %946 = vst [vmem:[#allocation3 + $0x30] sm:$0xff] %v938
  %947 = vst [vmem:[#allocation3 + $0x38] sm:$0xff] %v939
  %v948 = vld [vmem:[#allocation3] ss:$2 sm:$0xff]
  %s949 = scalar_lea.vmem [#allocation3], 16
  %v950 = vld [vmem:[%s949] ss:$2 sm:$0xff]
  %s951 = scalar_lea.vmem [#allocation3], 32
  %v952 = vld [vmem:[%s951] ss:$2 sm:$0xff]
  %s953 = scalar_lea.vmem [#allocation3], 48
  %v954 = vld [vmem:[%s953] ss:$2 sm:$0xff]
  %s955 = scalar_lea.vmem [#allocation3], 1
  %v956 = vld [vmem:[%s955] ss:$2 sm:$0xff]
  %s957 = scalar_lea.vmem [#allocation3], 17
  %v958 = vld [vmem:[%s957] ss:$2 sm:$0xff]
  %s959 = scalar_lea.vmem [#allocation3], 33
  %v960 = vld [vmem:[%s959] ss:$2 sm:$0xff]
  %s961 = scalar_lea.vmem [#allocation3], 49
  %v962 = vld [vmem:[%s961] ss:$2 sm:$0xff]
  %v963 = vrot.slane %v956, 7
  %v964 = vrot.slane %v958, 7
  %v965 = vrot.slane %v960, 7
  %v966 = vrot.slane %v962, 7
  %v967 = vsel %vm115, %v965, %v966
  %v968 = vsel %vm115, %v964, %v965
  %v969 = vsel %vm115, %v963, %v964
  %v970 = vsel %vm115, %v966, %v963
  %v971 = vand.u32 %v114, 3
  %v972 = vand.u32 %v132, 3
  %v973 = vand.u32 %v133, 3
  %v974 = vand.u32 %v134, 3
  %vm975 = vcmp.ne.s32.totalorder %v971, 0
  %vm976 = vcmp.ne.s32.totalorder %v972, 0
  %vm977 = vcmp.ne.s32.totalorder %v973, 0
  %vm978 = vcmp.ne.s32.totalorder %v974, 0
  %v979 = vsel %vm975, %v970, 0.0
  %v980 = vsel %vm976, %v969, 0.0
  %v981 = vsel %vm977, %v968, 0.0
  %v982 = vsel %vm978, %v967, 0.0
  %v983 = vld [vmem:[%s5] sm:$0xff]
  %v984 = vld [vmem:[%s5 + $0x8] sm:$0xff]
  %v985 = vld [vmem:[%s5 + $0x10] sm:$0xff]
  %v986 = vld [vmem:[%s5 + $0x18] sm:$0xff]
  %v987 = vld [vmem:[%s5 + $0x20] sm:$0xff]
  %v988 = vld [vmem:[%s5 + $0x28] sm:$0xff]
  %v989 = vld [vmem:[%s5 + $0x30] sm:$0xff]
  %v990 = vld [vmem:[%s5 + $0x38] sm:$0xff]
  %v991 = vld [vmem:[%s5 + $0x40] sm:$0xff]
  %v992 = vld [vmem:[%s5 + $0x48] sm:$0xff]
  %v993 = vld [vmem:[%s5 + $0x50] sm:$0xff]
  %v994 = vld [vmem:[%s5 + $0x58] sm:$0xff]
  %v995 = vld [vmem:[%s5 + $0x60] sm:$0xff]
  %v996 = vld [vmem:[%s5 + $0x68] sm:$0xff]
  %v997 = vld [vmem:[%s5 + $0x70] sm:$0xff]
  %v998 = vld [vmem:[%s5 + $0x78] sm:$0xff]
  %v999 = vld [vmem:[%s5 + $0x80] sm:$0xff]
  %v1000 = vld [vmem:[%s5 + $0x88] sm:$0xff]
  %v1001 = vld [vmem:[%s5 + $0x90] sm:$0xff]
  %v1002 = vld [vmem:[%s5 + $0x98] sm:$0xff]
  %v1003 = vld [vmem:[%s5 + $0xa0] sm:$0xff]
  %v1004 = vld [vmem:[%s5 + $0xa8] sm:$0xff]
  %v1005 = vld [vmem:[%s5 + $0xb0] sm:$0xff]
  %v1006 = vld [vmem:[%s5 + $0xb8] sm:$0xff]
  %v1007 = vld [vmem:[%s5 + $0xc0] sm:$0xff]
  %v1008 = vld [vmem:[%s5 + $0xc8] sm:$0xff]
  %v1009 = vld [vmem:[%s5 + $0xd0] sm:$0xff]
  %v1010 = vld [vmem:[%s5 + $0xd8] sm:$0xff]
  %v1011 = vld [vmem:[%s5 + $0xe0] sm:$0xff]
  %v1012 = vld [vmem:[%s5 + $0xe8] sm:$0xff]
  %v1013 = vld [vmem:[%s5 + $0xf0] sm:$0xff]
  %v1014 = vld [vmem:[%s5 + $0xf8] sm:$0xff]
  %v1015 = vld [vmem:[%s5 + $0x100] sm:$0xff]
  %v1016 = vld [vmem:[%s5 + $0x108] sm:$0xff]
  %v1017 = vld [vmem:[%s5 + $0x110] sm:$0xff]
  %v1018 = vld [vmem:[%s5 + $0x118] sm:$0xff]
  %v1019 = vld [vmem:[%s5 + $0x120] sm:$0xff]
  %v1020 = vld [vmem:[%s5 + $0x128] sm:$0xff]
  %v1021 = vld [vmem:[%s5 + $0x130] sm:$0xff]
  %v1022 = vld [vmem:[%s5 + $0x138] sm:$0xff]
  %v1023 = vld [vmem:[%s5 + $0x140] sm:$0xff]
  %v1024 = vld [vmem:[%s5 + $0x148] sm:$0xff]
  %v1025 = vld [vmem:[%s5 + $0x150] sm:$0xff]
  %v1026 = vld [vmem:[%s5 + $0x158] sm:$0xff]
  %v1027 = vld [vmem:[%s5 + $0x160] sm:$0xff]
  %v1028 = vld [vmem:[%s5 + $0x168] sm:$0xff]
  %v1029 = vld [vmem:[%s5 + $0x170] sm:$0xff]
  %v1030 = vld [vmem:[%s5 + $0x178] sm:$0xff]
  %v1031 = vld [vmem:[%s6] sm:$0x1]
  %v1033 = vlaneseq
  %v1034 = vshrl.u32 %v1033, 7
  %v1035 = vsub.s32 0, %v1034
  %v1036 = vrot.slane %v1031, %v1035
  %1038 = vmatprep.subr.mxu0 0.0
  %1039 = vmatpush1.msra.mxu0 %v998
  %1040 = vmatprep.subr.mxu0 0.0
  %1041 = vmatpush1.msra.mxu0 %v997
  %1042 = vmatprep.subr.mxu0 0.0
  %1043 = vmatpush1.msra.mxu0 %v996
  %1044 = vmatprep.subr.mxu0 0.0
  %1045 = vmatpush1.msra.mxu0 %v995
  %1046 = vmatprep.subr.mxu0 0.0
  %1047 = vmatpush1.msra.mxu0 %v994
  %1048 = vmatprep.subr.mxu0 0.0
  %1049 = vmatpush1.msra.mxu0 %v993
  %1050 = vmatprep.subr.mxu0 0.0
  %1051 = vmatpush1.msra.mxu0 %v992
  %1052 = vmatprep.subr.mxu0 0.0
  %1053 = vmatpush1.msra.mxu0 %v991
  %1054 = vmatprep.subr.mxu0 0.0
  %1055 = vmatpush1.msra.mxu0 %v990
  %1056 = vmatprep.subr.mxu0 0.0
  %1057 = vmatpush1.msra.mxu0 %v989
  %1058 = vmatprep.subr.mxu0 0.0
  %1059 = vmatpush1.msra.mxu0 %v988
  %1060 = vmatprep.subr.mxu0 0.0
  %1061 = vmatpush1.msra.mxu0 %v987
  %1062 = vmatprep.subr.mxu0 0.0
  %1063 = vmatpush1.msra.mxu0 %v986
  %1064 = vmatprep.subr.mxu0 0.0
  %1065 = vmatpush1.msra.mxu0 %v985
  %1066 = vmatprep.subr.mxu0 0.0
  %1067 = vmatpush1.msra.mxu0 %v984
  %1068 = vmatprep.subr.mxu0 0.0
  %1069 = vmatpush1.msra.mxu0 %v983
  %1070 = vmatprep.subr.mxu0 0.0
  %1071 = vmatpush2.msra.mxu0 %v1014
  %1072 = vmatprep.subr.mxu0 0.0
  %1073 = vmatpush2.msra.mxu0 %v1013
  %1074 = vmatprep.subr.mxu0 0.0
  %1075 = vmatpush2.msra.mxu0 %v1012
  %1076 = vmatprep.subr.mxu0 0.0
  %1077 = vmatpush2.msra.mxu0 %v1011
  %1078 = vmatprep.subr.mxu0 0.0
  %1079 = vmatpush2.msra.mxu0 %v1010
  %1080 = vmatprep.subr.mxu0 0.0
  %1081 = vmatpush2.msra.mxu0 %v1009
  %1082 = vmatprep.subr.mxu0 0.0
  %1083 = vmatpush2.msra.mxu0 %v1008
  %1084 = vmatprep.subr.mxu0 0.0
  %1085 = vmatpush2.msra.mxu0 %v1007
  %1086 = vmatprep.subr.mxu0 0.0
  %1087 = vmatpush2.msra.mxu0 %v1006
  %1088 = vmatprep.subr.mxu0 0.0
  %1089 = vmatpush2.msra.mxu0 %v1005
  %1090 = vmatprep.subr.mxu0 0.0
  %1091 = vmatpush2.msra.mxu0 %v1004
  %1092 = vmatprep.subr.mxu0 0.0
  %1093 = vmatpush2.msra.mxu0 %v1003
  %1094 = vmatprep.subr.mxu0 0.0
  %1095 = vmatpush2.msra.mxu0 %v1002
  %1096 = vmatprep.subr.mxu0 0.0
  %1097 = vmatpush2.msra.mxu0 %v1001
  %1098 = vmatprep.subr.mxu0 0.0
  %1099 = vmatpush2.msra.mxu0 %v1000
  %1100 = vmatprep.subr.mxu0 0.0
  %1101 = vmatpush2.msra.mxu0 %v999
  %1102 = vmatprep.mubr.f32.mxu0 %v948
  %1103 = vmatmul.mubr.f32.gmra.mxu0 %v979
  %v1104 = vpop.f32.mrf.mxu0
  %v1105 = vadd.f32 %v1036, %v1104
  %v1106 = vpop.f32.mrf.mxu0
  %1107 = vmatprep.mubr.f32.mxu0 %v950
  %1108 = vmatmul.mubr.f32.gmra.mxu0 %v980
  %v1109 = vpop.f32.mrf.mxu0
  %v1110 = vadd.f32 %v1036, %v1109
  %v1111 = vpop.f32.mrf.mxu0
  %1112 = vmatprep.mubr.f32.mxu0 %v952
  %1113 = vmatmul.mubr.f32.gmra.mxu0 %v981
  %v1114 = vpop.f32.mrf.mxu0
  %v1115 = vadd.f32 %v1036, %v1114
  %v1116 = vpop.f32.mrf.mxu0
  %1117 = vmatprep.mubr.f32.mxu0 %v954
  %1118 = vmatmul.mubr.f32.gmra.mxu0 %v982
  %v1119 = vpop.f32.mrf.mxu0
  %v1120 = vadd.f32 %v1036, %v1119
  %v1121 = vpop.f32.mrf.mxu0
  %1122 = vdwg.mxu0
  %1123 = vmatprep.subr.mxu0 0.0
  %1124 = vmatpush1.msra.mxu0 %v1030
  %1125 = vmatprep.subr.mxu0 0.0
  %1126 = vmatpush1.msra.mxu0 %v1029
  %1127 = vmatprep.subr.mxu0 0.0
  %1128 = vmatpush1.msra.mxu0 %v1028
  %1129 = vmatprep.subr.mxu0 0.0
  %1130 = vmatpush1.msra.mxu0 %v1027
  %1131 = vmatprep.subr.mxu0 0.0
  %1132 = vmatpush1.msra.mxu0 %v1026
  %1133 = vmatprep.subr.mxu0 0.0
  %1134 = vmatpush1.msra.mxu0 %v1025
  %1135 = vmatprep.subr.mxu0 0.0
  %1136 = vmatpush1.msra.mxu0 %v1024
  %1137 = vmatprep.subr.mxu0 0.0
  %1138 = vmatpush1.msra.mxu0 %v1023
  %1139 = vmatprep.subr.mxu0 0.0
  %1140 = vmatpush1.msra.mxu0 %v1022
  %1141 = vmatprep.subr.mxu0 0.0
  %1142 = vmatpush1.msra.mxu0 %v1021
  %1143 = vmatprep.subr.mxu0 0.0
  %1144 = vmatpush1.msra.mxu0 %v1020
  %1145 = vmatprep.subr.mxu0 0.0
  %1146 = vmatpush1.msra.mxu0 %v1019
  %1147 = vmatprep.subr.mxu0 0.0
  %1148 = vmatpush1.msra.mxu0 %v1018
  %1149 = vmatprep.subr.mxu0 0.0
  %1150 = vmatpush1.msra.mxu0 %v1017
  %1151 = vmatprep.subr.mxu0 0.0
  %1152 = vmatpush1.msra.mxu0 %v1016
  %1153 = vmatprep.subr.mxu0 0.0
  %1154 = vmatpush1.msra.mxu0 %v1015
  %1155 = vmatprep.subr.mxu0 0.0
  %1156 = vmatpush2.msra.mxu0 0.0
  %1157 = vmatprep.subr.mxu0 0.0
  %1158 = vmatpush2.msra.mxu0 0.0
  %1159 = vmatprep.subr.mxu0 0.0
  %1160 = vmatpush2.msra.mxu0 0.0
  %1161 = vmatprep.subr.mxu0 0.0
  %1162 = vmatpush2.msra.mxu0 0.0
  %1163 = vmatprep.subr.mxu0 0.0
  %1164 = vmatpush2.msra.mxu0 0.0
  %1165 = vmatprep.subr.mxu0 0.0
  %1166 = vmatpush2.msra.mxu0 0.0
  %1167 = vmatprep.subr.mxu0 0.0
  %1168 = vmatpush2.msra.mxu0 0.0
  %1169 = vmatprep.subr.mxu0 0.0
  %1170 = vmatpush2.msra.mxu0 0.0
  %1171 = vmatprep.subr.mxu0 0.0
  %1172 = vmatpush2.msra.mxu0 0.0
  %1173 = vmatprep.subr.mxu0 0.0
  %1174 = vmatpush2.msra.mxu0 0.0
  %1175 = vmatprep.subr.mxu0 0.0
  %1176 = vmatpush2.msra.mxu0 0.0
  %1177 = vmatprep.subr.mxu0 0.0
  %1178 = vmatpush2.msra.mxu0 0.0
  %1179 = vmatprep.subr.mxu0 0.0
  %1180 = vmatpush2.msra.mxu0 0.0
  %1181 = vmatprep.subr.mxu0 0.0
  %1182 = vmatpush2.msra.mxu0 0.0
  %1183 = vmatprep.subr.mxu0 0.0
  %1184 = vmatpush2.msra.mxu0 0.0
  %1185 = vmatprep.subr.mxu0 0.0
  %1186 = vmatpush2.msra.mxu0 0.0
  %1187 = vmatprep.mubr.f32.mxu0 0.0
  %1188 = vmatmul.mubr.f32.gmra.mxu0 %v956
  %v1189 = vpop.f32.mrf.mxu0
  %v1190 = vadd.f32 %v1105, %v1189
  %v1191 = vpop.f32.mrf.mxu0
  %1192 = vmatprep.mubr.f32.mxu0 0.0
  %1193 = vmatmul.mubr.f32.gmra.mxu0 %v958
  %v1194 = vpop.f32.mrf.mxu0
  %v1195 = vadd.f32 %v1110, %v1194
  %v1196 = vpop.f32.mrf.mxu0
  %1197 = vmatprep.mubr.f32.mxu0 0.0
  %1198 = vmatmul.mubr.f32.gmra.mxu0 %v960
  %v1199 = vpop.f32.mrf.mxu0
  %v1200 = vadd.f32 %v1115, %v1199
  %v1201 = vpop.f32.mrf.mxu0
  %1202 = vmatprep.mubr.f32.mxu0 0.0
  %1203 = vmatmul.mubr.f32.gmra.mxu0 %v962
  %v1204 = vpop.f32.mrf.mxu0
  %v1205 = vadd.f32 %v1120, %v1204
  %v1206 = vpop.f32.mrf.mxu0
  %1207 = vdwg.mxu0
  %v1208 = vmul.f32 %v1190, 0.01
  %v1209 = vmul.f32 %v1195, 0.01
  %v1210 = vmul.f32 %v1200, 0.01
  %v1211 = vmul.f32 %v1205, 0.01
  %v1212 = vmax.f32 %v1190, %v1208
  %v1213 = vmax.f32 %v1195, %v1209
  %v1214 = vmax.f32 %v1200, %v1210
  %v1215 = vmax.f32 %v1205, %v1211
  %1216 = vst [vmem:[#allocation4] sm:$0xff] %v1212
  %1217 = vst [vmem:[#allocation4 + $0x8] sm:$0xff] %v1213
  %1218 = vst [vmem:[#allocation4 + $0x10] sm:$0xff] %v1214
  %1219 = vst [vmem:[#allocation4 + $0x18] sm:$0xff] %v1215
  %v1220 = vld [vmem:[#allocation4] ss:$4 sm:$0xff]
  %v1221 = vld [vmem:[%s7] sm:$0x1]
  %v1222 = vlaneseq
  %v1223 = vshrl.u32 %v1222, 7
  %v1224 = vsub.s32 0, %v1223
  %v1225 = vrot.slane %v1221, %v1224
  %v1226 = vmul.f32 %v1220, %v1225
  %s1227 = scalar_lea.vmem [#allocation4], 1
  %v1228 = vld [vmem:[%s1227] ss:$4 sm:$0xff]
  %v1229 = vld [vmem:[%s7 + $0x1] sm:$0x1]
  %v1230 = vlaneseq
  %v1231 = vshrl.u32 %v1230, 7
  %v1232 = vsub.s32 0, %v1231
  %v1233 = vrot.slane %v1229, %v1232
  %v1234 = vmul.f32 %v1228, %v1233
  %v1235 = vadd.f32 %v1226, %v1234
  %s1236 = scalar_lea.vmem [#allocation4], 2
  %v1237 = vld [vmem:[%s1236] ss:$4 sm:$0xff]
  %v1238 = vld [vmem:[%s7 + $0x2] sm:$0x1]
  %v1239 = vlaneseq
  %v1240 = vshrl.u32 %v1239, 7
  %v1241 = vsub.s32 0, %v1240
  %v1242 = vrot.slane %v1238, %v1241
  %v1243 = vmul.f32 %v1237, %v1242
  %v1244 = vadd.f32 %v1235, %v1243
  %s1245 = scalar_lea.vmem [#allocation4], 3
  %v1246 = vld [vmem:[%s1245] ss:$4 sm:$0xff]
  %v1247 = vld [vmem:[%s7 + $0x3] sm:$0x1]
  %v1248 = vlaneseq
  %v1249 = vshrl.u32 %v1248, 7
  %v1250 = vsub.s32 0, %v1249
  %v1251 = vrot.slane %v1247, %v1250
  %v1252 = vmul.f32 %v1246, %v1251
  %v1253 = vadd.f32 %v1244, %v1252
  %1254 = vadd.xlane.f32.xlu0 %v1253
  %v1255 = vpop.xlane.xlu0 %1254
  %v1256 = vld [vmem:[#allocation5] sm:$0x1]
  %v1258 = vlaneseq
  %v1259 = vshrl.u32 %v1258, 7
  %v1260 = vsub.s32 0, %v1259
  %v1261 = vrot.slane %v1256, %v1260
  %v1263 = vadd.f32 %v1255, %v1261
  %vm1264 = vcmask 7168
  %1265 = vst.msk [vmem:[%s9] sm:$0xff] %vm1264, %v1263
  // Predicated region
  $region38: #{discriminator_forward.1} parent=0 // pred_check
    _
  $region39: #{discriminator_forward.1} parent=0 // pred_check_branch
    %1267 = sbr.rel (0) target = $region41
  $region40: #{discriminator_forward.1} parent=0 // pred_region
    _
  $region41: #{discriminator_forward.1} parent=0 // pred_fallthru
    _
  // Predicated region
  $region42: #{discriminator_forward.1} parent=0 // pred_check
    _
  $region43: #{discriminator_forward.1} parent=0 // pred_check_branch
    %1269 = sbr.rel (0) target = $region45
  $region44: #{discriminator_forward.1} parent=0 // pred_region
    _
  $region45: #{discriminator_forward.1} parent=0 // pred_fallthru
    _

</llo_original>
